<compile_context>
chip_gen: v5e
topology: v5e:2x2
jax: 0.10.0
libtpu: 0.0.40
codegen_flags: <defaults>
</compile_context>

<pallas_src>
import jax
import jax.numpy as jnp
from jax.experimental import pallas as pl
from jax.experimental.pallas import tpu as pltpu

HIDDEN = 512


def _round_up(n, m):
    return ((n + m - 1) // m) * m


def _qnet_kernel(x_ref, w1_ref, b1_ref, w2_ref, b2_ref, w3_ref, b3_ref, o_ref):
    # One batch tile per grid step; weights are VMEM-resident across steps.
    x = x_ref[...]  # (TB, in_pad) float32

    # Linear 1 + SiLU  (bf16 MXU operands, f32 accumulate, f32 elementwise)
    h1 = jnp.dot(x.astype(jnp.bfloat16), w1_ref[...],
                 preferred_element_type=jnp.float32) + b1_ref[...]
    h1 = h1 * jax.nn.sigmoid(h1)  # SiLU(x) = x * sigmoid(x)

    # Linear 2 + SiLU
    h2 = jnp.dot(h1.astype(jnp.bfloat16), w2_ref[...],
                 preferred_element_type=jnp.float32) + b2_ref[...]
    h2 = h2 * jax.nn.sigmoid(h2)

    # Output linear (lane-padded to 128 output columns)
    out = jnp.dot(h2.astype(jnp.bfloat16), w3_ref[...],
                  preferred_element_type=jnp.float32) + b3_ref[...]
    o_ref[...] = out.astype(o_ref.dtype)


def init_params(key, input_size, output_size):
    """float32 params matching torch.nn.Linear default init, stored (in, out)."""
    ks = jax.random.split(key, 6)

    def linear(kw, kb, fan_in, fan_out):
        bound = 1.0 / jnp.sqrt(fan_in)
        w = jax.random.uniform(kw, (fan_in, fan_out), jnp.float32, -bound, bound)
        b = jax.random.uniform(kb, (1, fan_out), jnp.float32, -bound, bound)
        return w, b

    w1, b1 = linear(ks[0], ks[1], input_size, HIDDEN)
    w2, b2 = linear(ks[2], ks[3], HIDDEN, HIDDEN)
    w3, b3 = linear(ks[4], ks[5], HIDDEN, output_size)
    return {"w1": w1, "b1": b1, "w2": w2, "b2": b2, "w3": w3, "b3": b3}


def prepare_params(params):
    """One-time prep: bf16 weights, K-dim pad for layer 1, 128-lane pad for output."""
    w1, b1 = params["w1"], params["b1"]
    w2, b2 = params["w2"], params["b2"]
    w3, b3 = params["w3"], params["b3"]

    in_size = w1.shape[0]
    out_size = w3.shape[1]
    in_pad = _round_up(in_size, 8)
    out_pad = _round_up(out_size, 128)

    w1p = jnp.zeros((in_pad, w1.shape[1]), jnp.float32).at[:in_size, :].set(w1)
    w3p = jnp.zeros((w3.shape[0], out_pad), jnp.float32).at[:, :out_size].set(w3)
    b3p = jnp.zeros((1, out_pad), jnp.float32).at[:, :out_size].set(b3)

    return {
        "w1": w1p.astype(jnp.bfloat16), "b1": b1,
        "w2": w2.astype(jnp.bfloat16), "b2": b2,
        "w3": w3p.astype(jnp.bfloat16), "b3": b3p,
        "in_size": in_size, "in_pad": in_pad,
        "out_size": out_size, "out_pad": out_pad,
    }


def qnetwork_cart_forward(x, prepared):
    """Fused QNetworkCart forward.

    x: (B, input_size) float32
    prepared: output of prepare_params()
    returns: (B, output_size) float32
    """
    w1, b1 = prepared["w1"], prepared["b1"]
    w2, b2 = prepared["w2"], prepared["b2"]
    w3, b3 = prepared["w3"], prepared["b3"]
    in_size, in_pad = prepared["in_size"], prepared["in_pad"]
    out_size, out_pad = prepared["out_size"], prepared["out_pad"]
    hidden = w1.shape[1]

    B = x.shape[0]
    # Batch tile: up to 256 rows per grid step (multiple of 8 for sublane tiling).
    TB = min(256, _round_up(B, 8))
    B_pad = _round_up(B, TB)

    x_p = jnp.zeros((B_pad, in_pad), jnp.float32)
    x_p = x_p.at[:B, :in_size].set(x.astype(jnp.float32))

    grid = (B_pad // TB,)

    flops = 2 * B_pad * (in_pad * hidden + hidden * hidden + hidden * out_pad)
    transcendentals = 2 * B_pad * hidden  # two SiLU layers (one sigmoid/exp each)
    bytes_accessed = (
        x_p.size * 4 + B_pad * out_pad * 4
        + (w1.size + w2.size + w3.size) * 2
        + (b1.size + b2.size + b3.size) * 4
    )

    out = pl.pallas_call(
        _qnet_kernel,
        out_shape=jax.ShapeDtypeStruct((B_pad, out_pad), jnp.float32),
        grid=grid,
        in_specs=[
            pl.BlockSpec((TB, in_pad), lambda i: (i, 0)),
            pl.BlockSpec(w1.shape, lambda i: (0, 0)),   # weights resident across grid
            pl.BlockSpec(b1.shape, lambda i: (0, 0)),
            pl.BlockSpec(w2.shape, lambda i: (0, 0)),
            pl.BlockSpec(b2.shape, lambda i: (0, 0)),
            pl.BlockSpec(w3.shape, lambda i: (0, 0)),
            pl.BlockSpec(b3.shape, lambda i: (0, 0)),
        ],
        out_specs=pl.BlockSpec((TB, out_pad), lambda i: (i, 0)),
        compiler_params=pltpu.CompilerParams(
            dimension_semantics=("parallel",)),
        cost_estimate=pl.CostEstimate(
            flops=flops,
            transcendentals=transcendentals,
            bytes_accessed=bytes_accessed),
    )(x_p, w1, b1, w2, b2, w3, b3)

    return out[:B, :out_size]


def reference_forward(x, p):
    """Pure-JAX f32 reference (true module semantics)."""
    h1 = jax.nn.silu(x @ p["w1"] + p["b1"])
    h2 = jax.nn.silu(h1 @ p["w2"] + p["b2"])
    return h2 @ p["w3"] + p["b3"]


if __name__ == "__main__":
    key = jax.random.PRNGKey(0)
    k_x, k_p = jax.random.split(key)

    # CartPole-like shapes: 4-dim observation, 2 actions, small batch.
    batch, input_size, output_size = 8, 4, 2
    x = jax.random.normal(k_x, (batch, input_size), jnp.float32)

    params = init_params(k_p, input_size, output_size)
    prepared = prepare_params(params)

    out = qnetwork_cart_forward(x, prepared)
    out = jax.block_until_ready(out)

    ref = reference_forward(x, params)
    assert out.shape == (batch, output_size)
    # bf16 weights / bf16 MXU operands vs f32 reference -> relaxed tolerance.
    assert jnp.allclose(out, ref, atol=2e-2, rtol=2e-2), "mismatch vs JAX reference"

    print("KERNEL_OK")
</pallas_src>

<mosaic_0001>
module attributes {stable_mosaic.version = 11 : i64} {
  func.func @_qnet_kernel(%arg0: i32, %arg1: memref<8x8xf32, #tpu.memory_space<vmem>>, %arg2: memref<8x512xbf16, #tpu.memory_space<vmem>>, %arg3: memref<1x512xf32, #tpu.memory_space<vmem>>, %arg4: memref<512x512xbf16, #tpu.memory_space<vmem>>, %arg5: memref<1x512xf32, #tpu.memory_space<vmem>>, %arg6: memref<512x128xbf16, #tpu.memory_space<vmem>>, %arg7: memref<1x128xf32, #tpu.memory_space<vmem>>, %arg8: memref<8x128xf32, #tpu.memory_space<vmem>>) attributes {dimension_semantics = [#tpu.dimension_semantics<parallel>], iteration_bounds = array<i64: 1>, scalar_prefetch = 0 : i64, scratch_operands = 0 : i64, tpu.core_type = #tpu.core_type<tc>, window_params = [{transform_indices = @transform_0, window_bounds = array<i64: 8, 8>}, {pipeline_mode = #tpu.pipeline_mode<synchronous>, transform_indices = @transform_1, window_bounds = array<i64: 8, 512>}, {pipeline_mode = #tpu.pipeline_mode<synchronous>, transform_indices = @transform_2, window_bounds = array<i64: 1, 512>}, {pipeline_mode = #tpu.pipeline_mode<synchronous>, transform_indices = @transform_3, window_bounds = array<i64: 512, 512>}, {pipeline_mode = #tpu.pipeline_mode<synchronous>, transform_indices = @transform_4, window_bounds = array<i64: 1, 512>}, {pipeline_mode = #tpu.pipeline_mode<synchronous>, transform_indices = @transform_5, window_bounds = array<i64: 512, 128>}, {pipeline_mode = #tpu.pipeline_mode<synchronous>, transform_indices = @transform_6, window_bounds = array<i64: 1, 128>}, {transform_indices = @transform_7, window_bounds = array<i64: 8, 128>}]} {
    %c0 = arith.constant 0 : index
    %c0_0 = arith.constant 0 : index
    %0 = vector.load %arg1[%c0, %c0_0] : memref<8x8xf32, #tpu.memory_space<vmem>>, vector<8x8xf32>
    %1 = arith.truncf %0 : vector<8x8xf32> to vector<8x8xbf16>
    %c0_1 = arith.constant 0 : index
    %c0_2 = arith.constant 0 : index
    %2 = vector.load %arg2[%c0_1, %c0_2] : memref<8x512xbf16, #tpu.memory_space<vmem>>, vector<8x512xbf16>
    %cst = arith.constant dense<0.000000e+00> : vector<8x512xf32>
    %3 = tpu.matmul %1, %2, %cst {dimension_numbers = #tpu.dot_dimension_numbers<[1], [0], [0], [1], [0, 0, 1, 1], [], []>} : vector<8x8xbf16>, vector<8x512xbf16>, vector<8x512xf32> -> vector<8x512xf32>
    %c0_3 = arith.constant 0 : index
    %c0_4 = arith.constant 0 : index
    %4 = vector.load %arg3[%c0_3, %c0_4] : memref<1x512xf32, #tpu.memory_space<vmem>>, vector<1x512xf32>
    %5 = vector.broadcast %4 : vector<1x512xf32> to vector<8x512xf32>
    %6 = arith.addf %3, %5 : vector<8x512xf32>
    %7 = arith.negf %6 : vector<8x512xf32>
    %8 = math.exp %7 : vector<8x512xf32>
    %cst_5 = arith.constant 1.000000e+00 : f32
    %9 = vector.broadcast %cst_5 : f32 to vector<8x512xf32>
    %10 = arith.addf %9, %8 : vector<8x512xf32>
    %11 = arith.divf %9, %10 : vector<8x512xf32>
    %12 = arith.mulf %6, %11 : vector<8x512xf32>
    %13 = arith.truncf %12 : vector<8x512xf32> to vector<8x512xbf16>
    %c0_6 = arith.constant 0 : index
    %c0_7 = arith.constant 0 : index
    %14 = vector.load %arg4[%c0_6, %c0_7] : memref<512x512xbf16, #tpu.memory_space<vmem>>, vector<512x512xbf16>
    %cst_8 = arith.constant dense<0.000000e+00> : vector<8x512xf32>
    %15 = tpu.matmul %13, %14, %cst_8 {dimension_numbers = #tpu.dot_dimension_numbers<[1], [0], [0], [1], [0, 0, 1, 1], [], []>} : vector<8x512xbf16>, vector<512x512xbf16>, vector<8x512xf32> -> vector<8x512xf32>
    %c0_9 = arith.constant 0 : index
    %c0_10 = arith.constant 0 : index
    %16 = vector.load %arg5[%c0_9, %c0_10] : memref<1x512xf32, #tpu.memory_space<vmem>>, vector<1x512xf32>
    %17 = vector.broadcast %16 : vector<1x512xf32> to vector<8x512xf32>
    %18 = arith.addf %15, %17 : vector<8x512xf32>
    %19 = arith.negf %18 : vector<8x512xf32>
    %20 = math.exp %19 : vector<8x512xf32>
    %cst_11 = arith.constant 1.000000e+00 : f32
    %21 = vector.broadcast %cst_11 : f32 to vector<8x512xf32>
    %22 = arith.addf %21, %20 : vector<8x512xf32>
    %23 = arith.divf %21, %22 : vector<8x512xf32>
    %24 = arith.mulf %18, %23 : vector<8x512xf32>
    %25 = arith.truncf %24 : vector<8x512xf32> to vector<8x512xbf16>
    %c0_12 = arith.constant 0 : index
    %c0_13 = arith.constant 0 : index
    %26 = vector.load %arg6[%c0_12, %c0_13] : memref<512x128xbf16, #tpu.memory_space<vmem>>, vector<512x128xbf16>
    %cst_14 = arith.constant dense<0.000000e+00> : vector<8x128xf32>
    %27 = tpu.matmul %25, %26, %cst_14 {dimension_numbers = #tpu.dot_dimension_numbers<[1], [0], [0], [1], [0, 0, 1, 1], [], []>} : vector<8x512xbf16>, vector<512x128xbf16>, vector<8x128xf32> -> vector<8x128xf32>
    %c0_15 = arith.constant 0 : index
    %c0_16 = arith.constant 0 : index
    %28 = vector.load %arg7[%c0_15, %c0_16] : memref<1x128xf32, #tpu.memory_space<vmem>>, vector<1x128xf32>
    %29 = vector.broadcast %28 : vector<1x128xf32> to vector<8x128xf32>
    %30 = arith.addf %27, %29 : vector<8x128xf32>
    %c0_17 = arith.constant 0 : index
    %c0_18 = arith.constant 0 : index
    %31 = vector.load %arg8[%c0_17, %c0_18] : memref<8x128xf32, #tpu.memory_space<vmem>>, vector<8x128xf32>
    tpu.vector_store %arg8[%c0_17, %c0_18], %30 {strides = array<i32>} : memref<8x128xf32, #tpu.memory_space<vmem>>, vector<8x128xf32>,
    return
  }
  func.func @transform_0(%arg0: i32) -> (i32, i32) {
    %c0_i32 = arith.constant 0 : i32
    %c0_i32_0 = arith.constant 0 : i32
    return %arg0, %c0_i32 : i32, i32
  }
  func.func @transform_1(%arg0: i32) -> (i32, i32) {
    %c0_i32 = arith.constant 0 : i32
    %c0_i32_0 = arith.constant 0 : i32
    %c0_i32_1 = arith.constant 0 : i32
    return %c0_i32, %c0_i32_0 : i32, i32
  }
  func.func @transform_2(%arg0: i32) -> (i32, i32) {
    %c0_i32 = arith.constant 0 : i32
    %c0_i32_0 = arith.constant 0 : i32
    %c0_i32_1 = arith.constant 0 : i32
    return %c0_i32, %c0_i32_0 : i32, i32
  }
  func.func @transform_3(%arg0: i32) -> (i32, i32) {
    %c0_i32 = arith.constant 0 : i32
    %c0_i32_0 = arith.constant 0 : i32
    %c0_i32_1 = arith.constant 0 : i32
    return %c0_i32, %c0_i32_0 : i32, i32
  }
  func.func @transform_4(%arg0: i32) -> (i32, i32) {
    %c0_i32 = arith.constant 0 : i32
    %c0_i32_0 = arith.constant 0 : i32
    %c0_i32_1 = arith.constant 0 : i32
    return %c0_i32, %c0_i32_0 : i32, i32
  }
  func.func @transform_5(%arg0: i32) -> (i32, i32) {
    %c0_i32 = arith.constant 0 : i32
    %c0_i32_0 = arith.constant 0 : i32
    %c0_i32_1 = arith.constant 0 : i32
    return %c0_i32, %c0_i32_0 : i32, i32
  }
  func.func @transform_6(%arg0: i32) -> (i32, i32) {
    %c0_i32 = arith.constant 0 : i32
    %c0_i32_0 = arith.constant 0 : i32
    %c0_i32_1 = arith.constant 0 : i32
    return %c0_i32, %c0_i32_0 : i32, i32
  }
  func.func @transform_7(%arg0: i32) -> (i32, i32) {
    %c0_i32 = arith.constant 0 : i32
    %c0_i32_0 = arith.constant 0 : i32
    return %arg0, %c0_i32 : i32, i32
  }
}

</mosaic_0001>

<llo_original>
// kernel: tpu_custom_call.1
$region0: #{tpu_custom_call.1}
  #allocation0 [shape = 'u32[]', space=smem, size = 0x4, offset = 0x4, fixed_abs, tag = 'smem constant byte address 0x4 - core index']
  #allocation1 [shape = 'u32[72,128]{1,0:T(1,128)}', space=vmem, size = 0x9000, scoped, tag = 'internal scratch']
  %s0 = inlined_call_operand.hbm [shape: f32[8,8], index: 0, kind: input, shape index: {}]
  %s1 = inlined_call_operand.hbm [shape: bf16[8,512], index: 1, kind: input, shape index: {}]
  %s2 = inlined_call_operand.hbm [shape: f32[1,512], index: 2, kind: input, shape index: {}]
  %s3 = inlined_call_operand.hbm [shape: bf16[512,512], index: 3, kind: input, shape index: {}]
  %s4 = inlined_call_operand.hbm [shape: f32[1,512], index: 4, kind: input, shape index: {}]
  %s5 = inlined_call_operand.hbm [shape: bf16[512,128], index: 5, kind: input, shape index: {}]
  %s6 = inlined_call_operand.vmem [shape: f32[1,128], index: 6, kind: input, shape index: {}]
  %s7 = inlined_call_operand.hbm [shape: f32[8,128], index: 7, kind: output, shape index: {}]
  %s8 = sld [smem:[#allocation0]]
  $region62: #{tpu_custom_call.1} parent=0
    _
  %s10 = ssub.s32 1, %s8
  %s11 = scalar_select 0, %s10, %s8
  $region1: #{tpu_custom_call.1} parent=0
    #allocation2 [shape = 'u8[4096]{0}', space=vmem, size = 0x1000, scoped, tag = 'input window, operand 0, single buffered']
    #allocation3 [shape = 's32[1]{0}', space=sflag, size = 0x4, scoped, tag = 'scoped memory for tpu_custom_call.1']
    #allocation4 [shape = 's32[1]{0}', space=sflag, size = 0x4, scoped, tag = 'scoped memory for tpu_custom_call.1']
    #allocation5 [shape = 'u8[8192]{0}', space=vmem, size = 0x2000, scoped, tag = 'input window, operand 1, single buffered']
    #allocation6 [shape = 's32[1]{0}', space=sflag, size = 0x4, scoped, tag = 'scoped memory for tpu_custom_call.1']
    #allocation7 [shape = 'u8[2048]{0}', space=vmem, size = 0x800, scoped, tag = 'input window, operand 2, single buffered']
    #allocation8 [shape = 'u8[524288]{0}', space=vmem, size = 0x80000, scoped, tag = 'input window, operand 3, single buffered']
    #allocation9 [shape = 's32[1]{0}', space=sflag, size = 0x4, scoped, tag = 'scoped memory for tpu_custom_call.1']
    #allocation10 [shape = 'u8[2048]{0}', space=vmem, size = 0x800, scoped, tag = 'input window, operand 4, single buffered']
    #allocation11 [shape = 'u8[131072]{0}', space=vmem, size = 0x20000, scoped, tag = 'input window, operand 5, single buffered']
    #allocation12 [shape = 's32[1]{0}', space=sflag, size = 0x4, scoped, tag = 'scoped memory for tpu_custom_call.1']
    #allocation13 [shape = 'u8[4096]{0}', space=vmem, size = 0x1000, scoped, tag = 'output window, operand 0, single buffered']
    %12 = vsyncpa [#allocation3], 0
    %13 = vsyncpa [#allocation6], 0
    %14 = vsyncpa [#allocation9], 0
    %15 = vsyncpa [#allocation12], 0
    %16 = vsyncpa [#allocation4], 0
    // Predicated region
    $region2: #{tpu_custom_call.1} parent=1 // pred_check
      _
    $region3: #{tpu_custom_call.1} parent=1 // pred_check_branch
      %18 = sbr.rel (0) target = $region5
    $region4: #{tpu_custom_call.1} parent=1 // pred_region
      %20 = vsyncadd [#allocation3], 0
      %s22 = sshll.u32 %s0, 4
      %s23 = int_to_ptr.hbm [resolvable:$true] %s22
      %s24 = sshll.u32 [#allocation2], 4
      %s25 = int_to_ptr.vmem [resolvable:$true] %s24
      %27 = dma.hbm_to_vmem [thread:$0]  %s23, 128, %s25, [#allocation3]
    $region5: #{tpu_custom_call.1} parent=1 // pred_fallthru
      _
    // Predicated region
    $region6: #{tpu_custom_call.1} parent=1 // pred_check
      _
    $region7: #{tpu_custom_call.1} parent=1 // pred_check_branch
      %29 = sbr.rel (0) target = $region9
    $region8: #{tpu_custom_call.1} parent=1 // pred_region
      %31 = vsyncadd [#allocation6], 0
      %s33 = sshll.u32 %s1, 4
      %s34 = int_to_ptr.hbm [resolvable:$true] %s33
      %s35 = sshll.u32 [#allocation5], 4
      %s36 = int_to_ptr.vmem [resolvable:$true] %s35
      %38 = dma.hbm_to_vmem [thread:$0]  %s34, 256, %s36, [#allocation6]
    $region9: #{tpu_custom_call.1} parent=1 // pred_fallthru
      _
    // Predicated region
    $region10: #{tpu_custom_call.1} parent=1 // pred_check
      _
    $region11: #{tpu_custom_call.1} parent=1 // pred_check_branch
      %40 = sbr.rel (0) target = $region13
    $region12: #{tpu_custom_call.1} parent=1 // pred_region
      %42 = vsyncadd [#allocation6], 0
      %s44 = sshll.u32 %s2, 4
      %s45 = int_to_ptr.hbm [resolvable:$true] %s44
      %s46 = sshll.u32 [#allocation7], 4
      %s47 = int_to_ptr.vmem [resolvable:$true] %s46
      %49 = dma.hbm_to_vmem [thread:$0]  %s45, 64, %s47, [#allocation6]
    $region13: #{tpu_custom_call.1} parent=1 // pred_fallthru
      _
    // Predicated region
    $region14: #{tpu_custom_call.1} parent=1 // pred_check
      _
    $region15: #{tpu_custom_call.1} parent=1 // pred_check_branch
      %51 = sbr.rel (0) target = $region17
    $region16: #{tpu_custom_call.1} parent=1 // pred_region
      %53 = vsyncadd [#allocation9], 0
      %s54 = sshll.u32 %s3, 4
      %s55 = int_to_ptr.hbm [resolvable:$true] %s54
      %s56 = sshll.u32 [#allocation8], 4
      %s57 = int_to_ptr.vmem [resolvable:$true] %s56
      %62 = dma.hbm_to_vmem [thread:$0]  %s55, 16384, %s57, [#allocation9], 256, 256, 16
    $region17: #{tpu_custom_call.1} parent=1 // pred_fallthru
      _
    // Predicated region
    $region18: #{tpu_custom_call.1} parent=1 // pred_check
      _
    $region19: #{tpu_custom_call.1} parent=1 // pred_check_branch
      %64 = sbr.rel (0) target = $region21
    $region20: #{tpu_custom_call.1} parent=1 // pred_region
      %66 = vsyncadd [#allocation9], 0
      %s68 = sshll.u32 %s4, 4
      %s69 = int_to_ptr.hbm [resolvable:$true] %s68
      %s70 = sshll.u32 [#allocation10], 4
      %s71 = int_to_ptr.vmem [resolvable:$true] %s70
      %73 = dma.hbm_to_vmem [thread:$0]  %s69, 64, %s71, [#allocation9]
    $region21: #{tpu_custom_call.1} parent=1 // pred_fallthru
      _
    // Predicated region
    $region22: #{tpu_custom_call.1} parent=1 // pred_check
      _
    $region23: #{tpu_custom_call.1} parent=1 // pred_check_branch
      %75 = sbr.rel (0) target = $region25
    $region24: #{tpu_custom_call.1} parent=1 // pred_region
      %77 = vsyncadd [#allocation12], 0
      %s78 = sshll.u32 %s5, 4
      %s79 = int_to_ptr.hbm [resolvable:$true] %s78
      %s80 = sshll.u32 [#allocation11], 4
      %s81 = int_to_ptr.vmem [resolvable:$true] %s80
      %86 = dma.hbm_to_vmem [thread:$0]  %s79, 4096, %s81, [#allocation12], 64, 64, 4
    $region25: #{tpu_custom_call.1} parent=1 // pred_fallthru
      _
    // Predicated region
    $region26: #{tpu_custom_call.1} parent=1 // pred_check
      _
    $region27: #{tpu_custom_call.1} parent=1 // pred_check_branch
      %88 = sbr.rel (0) target = $region29
    $region28: #{tpu_custom_call.1} parent=1 // pred_region
      _
    $region29: #{tpu_custom_call.1} parent=1 // pred_fallthru
      _
    // Predicated region
    $region30: #{tpu_custom_call.1} parent=1 // pred_check
      _
    $region31: #{tpu_custom_call.1} parent=1 // pred_check_branch
      %90 = sbr.rel (0) target = $region33
    $region32: #{tpu_custom_call.1} parent=1 // pred_region
      %92 = dma.done [#allocation3], 128
    $region33: #{tpu_custom_call.1} parent=1 // pred_fallthru
      _
    // Predicated region
    $region34: #{tpu_custom_call.1} parent=1 // pred_check
      _
    $region35: #{tpu_custom_call.1} parent=1 // pred_check_branch
      %94 = sbr.rel (0) target = $region37
    $region36: #{tpu_custom_call.1} parent=1 // pred_region
      %96 = dma.done [#allocation6], 256
    $region37: #{tpu_custom_call.1} parent=1 // pred_fallthru
      _
    // Predicated region
    $region38: #{tpu_custom_call.1} parent=1 // pred_check
      _
    $region39: #{tpu_custom_call.1} parent=1 // pred_check_branch
      %98 = sbr.rel (0) target = $region41
    $region40: #{tpu_custom_call.1} parent=1 // pred_region
      %100 = dma.done [#allocation6], 64
    $region41: #{tpu_custom_call.1} parent=1 // pred_fallthru
      _
    // Predicated region
    $region42: #{tpu_custom_call.1} parent=1 // pred_check
      _
    $region43: #{tpu_custom_call.1} parent=1 // pred_check_branch
      %102 = sbr.rel (0) target = $region45
    $region44: #{tpu_custom_call.1} parent=1 // pred_region
      %104 = dma.done [#allocation9], 16384
    $region45: #{tpu_custom_call.1} parent=1 // pred_fallthru
      _
    // Predicated region
    $region46: #{tpu_custom_call.1} parent=1 // pred_check
      _
    $region47: #{tpu_custom_call.1} parent=1 // pred_check_branch
      %106 = sbr.rel (0) target = $region49
    $region48: #{tpu_custom_call.1} parent=1 // pred_region
      %108 = dma.done [#allocation9], 64
    $region49: #{tpu_custom_call.1} parent=1 // pred_fallthru
      _
    // Predicated region
    $region50: #{tpu_custom_call.1} parent=1 // pred_check
      _
    $region51: #{tpu_custom_call.1} parent=1 // pred_check_branch
      %110 = sbr.rel (0) target = $region53
    $region52: #{tpu_custom_call.1} parent=1 // pred_region
      %112 = dma.done [#allocation12], 4096
    $region53: #{tpu_custom_call.1} parent=1 // pred_fallthru
      _
    %v114 = vld [vmem:[#allocation2] sm:$0xff]
    %v115 = vpack.c.bf16 %v114, %v114
    %v116 = vld [vmem:[#allocation5] sm:$0xff]
    %v117 = vld [vmem:[#allocation5 + $0x8] sm:$0xff]
    %v118 = vld [vmem:[#allocation7] sm:$0xf]
    %v120 = vperm.slane %v118, 0
    %v121 = vperm.slane %v118, 1
    %v122 = vperm.slane %v118, 2
    %v123 = vperm.slane %v118, 3
    %v130 = vunpack.c.l.b16 %v116
    %v131 = vunpack.c.h.b16 %v116
    %v132 = vunpack.c.l.b16 %v117
    %v133 = vunpack.c.h.b16 %v117
    %v134 = vpack.c.b16 %v130, %v130
    %v135 = vpack.c.b16 %v131, %v131
    %v136 = vpack.c.b16 %v132, %v132
    %v137 = vpack.c.b16 %v133, %v133
    %vm138 = vcmask 64512
    %v140 = vsel %vm138, %v115, 0
    %vm142 = vcmask 1043456
    %v144 = vsel %vm142, %v134, 0
    %v147 = vsel %vm142, %v135, 0
    %v150 = vsel %vm142, %v136, 0
    %v153 = vsel %vm142, %v137, 0
    %155 = vmatpush.bf16.msra.mxu0 0
    %156 = vmatpush.bf16.msra.mxu0 0
    %157 = vmatpush.bf16.msra.mxu0 0
    %158 = vmatpush.bf16.msra.mxu0 0
    %159 = vmatpush.bf16.msra.mxu0 0
    %160 = vmatpush.bf16.msra.mxu0 0
    %161 = vmatpush.bf16.msra.mxu0 0
    %162 = vmatpush.bf16.msra.mxu0 %v144
    %163 = vmatmul.bf16.gmra.mxu0 %v140
    %v164 = vpop.f32.mrf.mxu0
    %v165 = vadd.f32 %v120, %v164
    %v166 = vpop.f32.mrf.mxu0
    %167 = vdwg.mxu0
    %168 = vmatpush.bf16.msra.mxu0 0
    %169 = vmatpush.bf16.msra.mxu0 0
    %170 = vmatpush.bf16.msra.mxu0 0
    %171 = vmatpush.bf16.msra.mxu0 0
    %172 = vmatpush.bf16.msra.mxu0 0
    %173 = vmatpush.bf16.msra.mxu0 0
    %174 = vmatpush.bf16.msra.mxu0 0
    %175 = vmatpush.bf16.msra.mxu0 %v147
    %176 = vmatmul.bf16.gmra.mxu0 %v140
    %v177 = vpop.f32.mrf.mxu0
    %v178 = vadd.f32 %v121, %v177
    %v179 = vpop.f32.mrf.mxu0
    %180 = vdwg.mxu0
    %181 = vmatpush.bf16.msra.mxu0 0
    %182 = vmatpush.bf16.msra.mxu0 0
    %183 = vmatpush.bf16.msra.mxu0 0
    %184 = vmatpush.bf16.msra.mxu0 0
    %185 = vmatpush.bf16.msra.mxu0 0
    %186 = vmatpush.bf16.msra.mxu0 0
    %187 = vmatpush.bf16.msra.mxu0 0
    %188 = vmatpush.bf16.msra.mxu0 %v150
    %189 = vmatmul.bf16.gmra.mxu0 %v140
    %v190 = vpop.f32.mrf.mxu0
    %v191 = vadd.f32 %v122, %v190
    %v192 = vpop.f32.mrf.mxu0
    %193 = vdwg.mxu0
    %194 = vmatpush.bf16.msra.mxu0 0
    %195 = vmatpush.bf16.msra.mxu0 0
    %196 = vmatpush.bf16.msra.mxu0 0
    %197 = vmatpush.bf16.msra.mxu0 0
    %198 = vmatpush.bf16.msra.mxu0 0
    %199 = vmatpush.bf16.msra.mxu0 0
    %200 = vmatpush.bf16.msra.mxu0 0
    %201 = vmatpush.bf16.msra.mxu0 %v153
    %202 = vmatmul.bf16.gmra.mxu0 %v140
    %v203 = vpop.f32.mrf.mxu0
    %v204 = vadd.f32 %v123, %v203
    %v205 = vpop.f32.mrf.mxu0
    %206 = vdwg.mxu0
    %v207 = vxor.u32 %v165, 2147483648
    %v208 = vxor.u32 %v178, 2147483648
    %v209 = vxor.u32 %v191, 2147483648
    %v210 = vxor.u32 %v204, 2147483648
    %v211 = vmul.f32 %v207, 1.442695
    %v212 = vpow.pop %v211
    %v213 = vmul.f32 %v208, 1.442695
    %v214 = vpow.pop %v213
    %v215 = vmul.f32 %v209, 1.442695
    %v216 = vpow.pop %v215
    %v217 = vmul.f32 %v210, 1.442695
    %v218 = vpow.pop %v217
    %v219 = vadd.f32 %v212, 1.0
    %v220 = vadd.f32 %v214, 1.0
    %v221 = vadd.f32 %v216, 1.0
    %v222 = vadd.f32 %v218, 1.0
    %v223 = vrcp.pop %v219
    %v224 = vmul.f32 %v219, %v223
    %v225 = vsub.f32 1.0, %v224
    %v226 = vmul.f32 %v223, %v225
    %v227 = vadd.f32 %v223, %v226
    %vm228 = vweird.f32 %v219
    %vm229 = vweird.f32 %v223
    %vm230 = vmor %vm228, %vm229
    %v231 = vsel %vm230, %v223, %v227
    %v232 = vand.u32 2147483647, %v219
    %vm233 = vcmp.eq.f32.partialorder %v232, 8.507059e+37
    %v234 = vand.u32 %v219, 2147483648
    %v235 = vor.u32 1.1754944e-38, %v234
    %v236 = vsel %vm233, %v235, %v231
    %v237 = vmul.f32 1.0, %v236
    %v238 = vrcp.pop %v220
    %v239 = vmul.f32 %v220, %v238
    %v240 = vsub.f32 1.0, %v239
    %v241 = vmul.f32 %v238, %v240
    %v242 = vadd.f32 %v238, %v241
    %vm243 = vweird.f32 %v220
    %vm244 = vweird.f32 %v238
    %vm245 = vmor %vm243, %vm244
    %v246 = vsel %vm245, %v238, %v242
    %v247 = vand.u32 2147483647, %v220
    %vm248 = vcmp.eq.f32.partialorder %v247, 8.507059e+37
    %v249 = vand.u32 %v220, 2147483648
    %v250 = vor.u32 1.1754944e-38, %v249
    %v251 = vsel %vm248, %v250, %v246
    %v252 = vmul.f32 1.0, %v251
    %v253 = vrcp.pop %v221
    %v254 = vmul.f32 %v221, %v253
    %v255 = vsub.f32 1.0, %v254
    %v256 = vmul.f32 %v253, %v255
    %v257 = vadd.f32 %v253, %v256
    %vm258 = vweird.f32 %v221
    %vm259 = vweird.f32 %v253
    %vm260 = vmor %vm258, %vm259
    %v261 = vsel %vm260, %v253, %v257
    %v262 = vand.u32 2147483647, %v221
    %vm263 = vcmp.eq.f32.partialorder %v262, 8.507059e+37
    %v264 = vand.u32 %v221, 2147483648
    %v265 = vor.u32 1.1754944e-38, %v264
    %v266 = vsel %vm263, %v265, %v261
    %v267 = vmul.f32 1.0, %v266
    %v268 = vrcp.pop %v222
    %v269 = vmul.f32 %v222, %v268
    %v270 = vsub.f32 1.0, %v269
    %v271 = vmul.f32 %v268, %v270
    %v272 = vadd.f32 %v268, %v271
    %vm273 = vweird.f32 %v222
    %vm274 = vweird.f32 %v268
    %vm275 = vmor %vm273, %vm274
    %v276 = vsel %vm275, %v268, %v272
    %v277 = vand.u32 2147483647, %v222
    %vm278 = vcmp.eq.f32.partialorder %v277, 8.507059e+37
    %v279 = vand.u32 %v222, 2147483648
    %v280 = vor.u32 1.1754944e-38, %v279
    %v281 = vsel %vm278, %v280, %v276
    %v282 = vmul.f32 1.0, %v281
    %v283 = vmul.f32 %v165, %v237
    %v284 = vmul.f32 %v178, %v252
    %v285 = vmul.f32 %v191, %v267
    %v286 = vmul.f32 %v204, %v282
    %v287 = vpack.c.bf16 %v283, %v283
    %v288 = vpack.c.bf16 %v284, %v284
    %v289 = vpack.c.bf16 %v285, %v285
    %v290 = vpack.c.bf16 %v286, %v286
    %v291 = vld [vmem:[#allocation8] sm:$0xff]
    %v292 = vld [vmem:[#allocation8 + $0x8] sm:$0xff]
    %v293 = vld [vmem:[#allocation8 + $0x10] sm:$0xff]
    %v294 = vld [vmem:[#allocation8 + $0x18] sm:$0xff]
    %v295 = vld [vmem:[#allocation8 + $0x20] sm:$0xff]
    %v296 = vld [vmem:[#allocation8 + $0x28] sm:$0xff]
    %v297 = vld [vmem:[#allocation8 + $0x30] sm:$0xff]
    %v298 = vld [vmem:[#allocation8 + $0x38] sm:$0xff]
    %v299 = vld [vmem:[#allocation8 + $0x40] sm:$0xff]
    %v300 = vld [vmem:[#allocation8 + $0x48] sm:$0xff]
    %v301 = vld [vmem:[#allocation8 + $0x50] sm:$0xff]
    %v302 = vld [vmem:[#allocation8 + $0x58] sm:$0xff]
    %v303 = vld [vmem:[#allocation8 + $0x60] sm:$0xff]
    %v304 = vld [vmem:[#allocation8 + $0x68] sm:$0xff]
    %v305 = vld [vmem:[#allocation8 + $0x70] sm:$0xff]
    %v306 = vld [vmem:[#allocation8 + $0x78] sm:$0xff]
    %v307 = vld [vmem:[#allocation8 + $0x80] sm:$0xff]
    %v308 = vld [vmem:[#allocation8 + $0x88] sm:$0xff]
    %v309 = vld [vmem:[#allocation8 + $0x90] sm:$0xff]
    %v310 = vld [vmem:[#allocation8 + $0x98] sm:$0xff]
    %v311 = vld [vmem:[#allocation8 + $0xa0] sm:$0xff]
    %v312 = vld [vmem:[#allocation8 + $0xa8] sm:$0xff]
    %v313 = vld [vmem:[#allocation8 + $0xb0] sm:$0xff]
    %v314 = vld [vmem:[#allocation8 + $0xb8] sm:$0xff]
    %v315 = vld [vmem:[#allocation8 + $0xc0] sm:$0xff]
    %v316 = vld [vmem:[#allocation8 + $0xc8] sm:$0xff]
    %v317 = vld [vmem:[#allocation8 + $0xd0] sm:$0xff]
    %v318 = vld [vmem:[#allocation8 + $0xd8] sm:$0xff]
    %v319 = vld [vmem:[#allocation8 + $0xe0] sm:$0xff]
    %v320 = vld [vmem:[#allocation8 + $0xe8] sm:$0xff]
    %v321 = vld [vmem:[#allocation8 + $0xf0] sm:$0xff]
    %v322 = vld [vmem:[#allocation8 + $0xf8] sm:$0xff]
    %v323 = vld [vmem:[#allocation8 + $0x100] sm:$0xff]
    %v324 = vld [vmem:[#allocation8 + $0x108] sm:$0xff]
    %v325 = vld [vmem:[#allocation8 + $0x110] sm:$0xff]
    %v326 = vld [vmem:[#allocation8 + $0x118] sm:$0xff]
    %v327 = vld [vmem:[#allocation8 + $0x120] sm:$0xff]
    %v328 = vld [vmem:[#allocation8 + $0x128] sm:$0xff]
    %v329 = vld [vmem:[#allocation8 + $0x130] sm:$0xff]
    %v330 = vld [vmem:[#allocation8 + $0x138] sm:$0xff]
    %v331 = vld [vmem:[#allocation8 + $0x140] sm:$0xff]
    %v332 = vld [vmem:[#allocation8 + $0x148] sm:$0xff]
    %v333 = vld [vmem:[#allocation8 + $0x150] sm:$0xff]
    %v334 = vld [vmem:[#allocation8 + $0x158] sm:$0xff]
    %v335 = vld [vmem:[#allocation8 + $0x160] sm:$0xff]
    %v336 = vld [vmem:[#allocation8 + $0x168] sm:$0xff]
    %v337 = vld [vmem:[#allocation8 + $0x170] sm:$0xff]
    %v338 = vld [vmem:[#allocation8 + $0x178] sm:$0xff]
    %v339 = vld [vmem:[#allocation8 + $0x180] sm:$0xff]
    %v340 = vld [vmem:[#allocation8 + $0x188] sm:$0xff]
    %v341 = vld [vmem:[#allocation8 + $0x190] sm:$0xff]
    %v342 = vld [vmem:[#allocation8 + $0x198] sm:$0xff]
    %v343 = vld [vmem:[#allocation8 + $0x1a0] sm:$0xff]
    %v344 = vld [vmem:[#allocation8 + $0x1a8] sm:$0xff]
    %v345 = vld [vmem:[#allocation8 + $0x1b0] sm:$0xff]
    %v346 = vld [vmem:[#allocation8 + $0x1b8] sm:$0xff]
    %v347 = vld [vmem:[#allocation8 + $0x1c0] sm:$0xff]
    %v348 = vld [vmem:[#allocation8 + $0x1c8] sm:$0xff]
    %v349 = vld [vmem:[#allocation8 + $0x1d0] sm:$0xff]
    %v350 = vld [vmem:[#allocation8 + $0x1d8] sm:$0xff]
    %v351 = vld [vmem:[#allocation8 + $0x1e0] sm:$0xff]
    %v352 = vld [vmem:[#allocation8 + $0x1e8] sm:$0xff]
    %v353 = vld [vmem:[#allocation8 + $0x1f0] sm:$0xff]
    %v354 = vld [vmem:[#allocation8 + $0x1f8] sm:$0xff]
    %v355 = vld [vmem:[#allocation8 + $0x200] sm:$0xff]
    %v356 = vld [vmem:[#allocation8 + $0x208] sm:$0xff]
    %v357 = vld [vmem:[#allocation8 + $0x210] sm:$0xff]
    %v358 = vld [vmem:[#allocation8 + $0x218] sm:$0xff]
    %v359 = vld [vmem:[#allocation8 + $0x220] sm:$0xff]
    %v360 = vld [vmem:[#allocation8 + $0x228] sm:$0xff]
    %v361 = vld [vmem:[#allocation8 + $0x230] sm:$0xff]
    %v362 = vld [vmem:[#allocation8 + $0x238] sm:$0xff]
    %v363 = vld [vmem:[#allocation8 + $0x240] sm:$0xff]
    %v364 = vld [vmem:[#allocation8 + $0x248] sm:$0xff]
    %v365 = vld [vmem:[#allocation8 + $0x250] sm:$0xff]
    %v366 = vld [vmem:[#allocation8 + $0x258] sm:$0xff]
    %v367 = vld [vmem:[#allocation8 + $0x260] sm:$0xff]
    %v368 = vld [vmem:[#allocation8 + $0x268] sm:$0xff]
    %v369 = vld [vmem:[#allocation8 + $0x270] sm:$0xff]
    %v370 = vld [vmem:[#allocation8 + $0x278] sm:$0xff]
    %v371 = vld [vmem:[#allocation8 + $0x280] sm:$0xff]
    %v372 = vld [vmem:[#allocation8 + $0x288] sm:$0xff]
    %v373 = vld [vmem:[#allocation8 + $0x290] sm:$0xff]
    %v374 = vld [vmem:[#allocation8 + $0x298] sm:$0xff]
    %v375 = vld [vmem:[#allocation8 + $0x2a0] sm:$0xff]
    %v376 = vld [vmem:[#allocation8 + $0x2a8] sm:$0xff]
    %v377 = vld [vmem:[#allocation8 + $0x2b0] sm:$0xff]
    %v378 = vld [vmem:[#allocation8 + $0x2b8] sm:$0xff]
    %v379 = vld [vmem:[#allocation8 + $0x2c0] sm:$0xff]
    %v380 = vld [vmem:[#allocation8 + $0x2c8] sm:$0xff]
    %v381 = vld [vmem:[#allocation8 + $0x2d0] sm:$0xff]
    %v382 = vld [vmem:[#allocation8 + $0x2d8] sm:$0xff]
    %v383 = vld [vmem:[#allocation8 + $0x2e0] sm:$0xff]
    %v384 = vld [vmem:[#allocation8 + $0x2e8] sm:$0xff]
    %v385 = vld [vmem:[#allocation8 + $0x2f0] sm:$0xff]
    %v386 = vld [vmem:[#allocation8 + $0x2f8] sm:$0xff]
    %v387 = vld [vmem:[#allocation8 + $0x300] sm:$0xff]
    %v388 = vld [vmem:[#allocation8 + $0x308] sm:$0xff]
    %v389 = vld [vmem:[#allocation8 + $0x310] sm:$0xff]
    %v390 = vld [vmem:[#allocation8 + $0x318] sm:$0xff]
    %v391 = vld [vmem:[#allocation8 + $0x320] sm:$0xff]
    %v392 = vld [vmem:[#allocation8 + $0x328] sm:$0xff]
    %v393 = vld [vmem:[#allocation8 + $0x330] sm:$0xff]
    %v394 = vld [vmem:[#allocation8 + $0x338] sm:$0xff]
    %v395 = vld [vmem:[#allocation8 + $0x340] sm:$0xff]
    %v396 = vld [vmem:[#allocation8 + $0x348] sm:$0xff]
    %v397 = vld [vmem:[#allocation8 + $0x350] sm:$0xff]
    %v398 = vld [vmem:[#allocation8 + $0x358] sm:$0xff]
    %v399 = vld [vmem:[#allocation8 + $0x360] sm:$0xff]
    %v400 = vld [vmem:[#allocation8 + $0x368] sm:$0xff]
    %v401 = vld [vmem:[#allocation8 + $0x370] sm:$0xff]
    %v402 = vld [vmem:[#allocation8 + $0x378] sm:$0xff]
    %v403 = vld [vmem:[#allocation8 + $0x380] sm:$0xff]
    %v404 = vld [vmem:[#allocation8 + $0x388] sm:$0xff]
    %v405 = vld [vmem:[#allocation8 + $0x390] sm:$0xff]
    %v406 = vld [vmem:[#allocation8 + $0x398] sm:$0xff]
    %v407 = vld [vmem:[#allocation8 + $0x3a0] sm:$0xff]
    %v408 = vld [vmem:[#allocation8 + $0x3a8] sm:$0xff]
    %v409 = vld [vmem:[#allocation8 + $0x3b0] sm:$0xff]
    %v410 = vld [vmem:[#allocation8 + $0x3b8] sm:$0xff]
    %v411 = vld [vmem:[#allocation8 + $0x3c0] sm:$0xff]
    %v412 = vld [vmem:[#allocation8 + $0x3c8] sm:$0xff]
    %v413 = vld [vmem:[#allocation8 + $0x3d0] sm:$0xff]
    %v414 = vld [vmem:[#allocation8 + $0x3d8] sm:$0xff]
    %v415 = vld [vmem:[#allocation8 + $0x3e0] sm:$0xff]
    %v416 = vld [vmem:[#allocation8 + $0x3e8] sm:$0xff]
    %v417 = vld [vmem:[#allocation8 + $0x3f0] sm:$0xff]
    %v418 = vld [vmem:[#allocation8 + $0x3f8] sm:$0xff]
    %v419 = vld [vmem:[#allocation10] sm:$0xf]
    %v421 = vperm.slane %v419, 0
    %v422 = vperm.slane %v419, 1
    %v423 = vperm.slane %v419, 2
    %v424 = vperm.slane %v419, 3
    %v557 = vunpack.c.l.b16 %v291
    %v558 = vunpack.c.h.b16 %v291
    %v559 = vunpack.c.l.b16 %v292
    %v560 = vunpack.c.h.b16 %v292
    %v561 = vunpack.c.l.b16 %v293
    %v562 = vunpack.c.h.b16 %v293
    %v563 = vunpack.c.l.b16 %v294
    %v564 = vunpack.c.h.b16 %v294
    %v565 = vunpack.c.l.b16 %v295
    %v566 = vunpack.c.h.b16 %v295
    %v567 = vunpack.c.l.b16 %v296
    %v568 = vunpack.c.h.b16 %v296
    %v569 = vunpack.c.l.b16 %v297
    %v570 = vunpack.c.h.b16 %v297
    %v571 = vunpack.c.l.b16 %v298
    %v572 = vunpack.c.h.b16 %v298
    %v573 = vunpack.c.l.b16 %v299
    %v574 = vunpack.c.h.b16 %v299
    %v575 = vunpack.c.l.b16 %v300
    %v576 = vunpack.c.h.b16 %v300
    %v577 = vunpack.c.l.b16 %v301
    %v578 = vunpack.c.h.b16 %v301
    %v579 = vunpack.c.l.b16 %v302
    %v580 = vunpack.c.h.b16 %v302
    %v581 = vunpack.c.l.b16 %v303
    %v582 = vunpack.c.h.b16 %v303
    %v583 = vunpack.c.l.b16 %v304
    %v584 = vunpack.c.h.b16 %v304
    %v585 = vunpack.c.l.b16 %v305
    %v586 = vunpack.c.h.b16 %v305
    %v587 = vunpack.c.l.b16 %v306
    %v588 = vunpack.c.h.b16 %v306
    %v589 = vunpack.c.l.b16 %v307
    %v590 = vunpack.c.h.b16 %v307
    %v591 = vunpack.c.l.b16 %v308
    %v592 = vunpack.c.h.b16 %v308
    %v593 = vunpack.c.l.b16 %v309
    %v594 = vunpack.c.h.b16 %v309
    %v595 = vunpack.c.l.b16 %v310
    %v596 = vunpack.c.h.b16 %v310
    %v597 = vunpack.c.l.b16 %v311
    %v598 = vunpack.c.h.b16 %v311
    %v599 = vunpack.c.l.b16 %v312
    %v600 = vunpack.c.h.b16 %v312
    %v601 = vunpack.c.l.b16 %v313
    %v602 = vunpack.c.h.b16 %v313
    %v603 = vunpack.c.l.b16 %v314
    %v604 = vunpack.c.h.b16 %v314
    %v605 = vunpack.c.l.b16 %v315
    %v606 = vunpack.c.h.b16 %v315
    %v607 = vunpack.c.l.b16 %v316
    %v608 = vunpack.c.h.b16 %v316
    %v609 = vunpack.c.l.b16 %v317
    %v610 = vunpack.c.h.b16 %v317
    %v611 = vunpack.c.l.b16 %v318
    %v612 = vunpack.c.h.b16 %v318
    %v613 = vunpack.c.l.b16 %v319
    %v614 = vunpack.c.h.b16 %v319
    %v615 = vunpack.c.l.b16 %v320
    %v616 = vunpack.c.h.b16 %v320
    %v617 = vunpack.c.l.b16 %v321
    %v618 = vunpack.c.h.b16 %v321
    %v619 = vunpack.c.l.b16 %v322
    %v620 = vunpack.c.h.b16 %v322
    %v621 = vunpack.c.l.b16 %v323
    %v622 = vunpack.c.h.b16 %v323
    %v623 = vunpack.c.l.b16 %v324
    %v624 = vunpack.c.h.b16 %v324
    %v625 = vunpack.c.l.b16 %v325
    %v626 = vunpack.c.h.b16 %v325
    %v627 = vunpack.c.l.b16 %v326
    %v628 = vunpack.c.h.b16 %v326
    %v629 = vunpack.c.l.b16 %v327
    %v630 = vunpack.c.h.b16 %v327
    %v631 = vunpack.c.l.b16 %v328
    %v632 = vunpack.c.h.b16 %v328
    %v633 = vunpack.c.l.b16 %v329
    %v634 = vunpack.c.h.b16 %v329
    %v635 = vunpack.c.l.b16 %v330
    %v636 = vunpack.c.h.b16 %v330
    %v637 = vunpack.c.l.b16 %v331
    %v638 = vunpack.c.h.b16 %v331
    %v639 = vunpack.c.l.b16 %v332
    %v640 = vunpack.c.h.b16 %v332
    %v641 = vunpack.c.l.b16 %v333
    %v642 = vunpack.c.h.b16 %v333
    %v643 = vunpack.c.l.b16 %v334
    %v644 = vunpack.c.h.b16 %v334
    %v645 = vunpack.c.l.b16 %v335
    %v646 = vunpack.c.h.b16 %v335
    %v647 = vunpack.c.l.b16 %v336
    %v648 = vunpack.c.h.b16 %v336
    %v649 = vunpack.c.l.b16 %v337
    %v650 = vunpack.c.h.b16 %v337
    %v651 = vunpack.c.l.b16 %v338
    %v652 = vunpack.c.h.b16 %v338
    %v653 = vunpack.c.l.b16 %v339
    %v654 = vunpack.c.h.b16 %v339
    %v655 = vunpack.c.l.b16 %v340
    %v656 = vunpack.c.h.b16 %v340
    %v657 = vunpack.c.l.b16 %v341
    %v658 = vunpack.c.h.b16 %v341
    %v659 = vunpack.c.l.b16 %v342
    %v660 = vunpack.c.h.b16 %v342
    %v661 = vunpack.c.l.b16 %v343
    %v662 = vunpack.c.h.b16 %v343
    %v663 = vunpack.c.l.b16 %v344
    %v664 = vunpack.c.h.b16 %v344
    %v665 = vunpack.c.l.b16 %v345
    %v666 = vunpack.c.h.b16 %v345
    %v667 = vunpack.c.l.b16 %v346
    %v668 = vunpack.c.h.b16 %v346
    %v669 = vunpack.c.l.b16 %v347
    %v670 = vunpack.c.h.b16 %v347
    %v671 = vunpack.c.l.b16 %v348
    %v672 = vunpack.c.h.b16 %v348
    %v673 = vunpack.c.l.b16 %v349
    %v674 = vunpack.c.h.b16 %v349
    %v675 = vunpack.c.l.b16 %v350
    %v676 = vunpack.c.h.b16 %v350
    %v677 = vunpack.c.l.b16 %v351
    %v678 = vunpack.c.h.b16 %v351
    %v679 = vunpack.c.l.b16 %v352
    %v680 = vunpack.c.h.b16 %v352
    %v681 = vunpack.c.l.b16 %v353
    %v682 = vunpack.c.h.b16 %v353
    %v683 = vunpack.c.l.b16 %v354
    %v684 = vunpack.c.h.b16 %v354
    %v685 = vunpack.c.l.b16 %v355
    %v686 = vunpack.c.h.b16 %v355
    %v687 = vunpack.c.l.b16 %v356
    %v688 = vunpack.c.h.b16 %v356
    %v689 = vunpack.c.l.b16 %v357
    %v690 = vunpack.c.h.b16 %v357
    %v691 = vunpack.c.l.b16 %v358
    %v692 = vunpack.c.h.b16 %v358
    %v693 = vunpack.c.l.b16 %v359
    %v694 = vunpack.c.h.b16 %v359
    %v695 = vunpack.c.l.b16 %v360
    %v696 = vunpack.c.h.b16 %v360
    %v697 = vunpack.c.l.b16 %v361
    %v698 = vunpack.c.h.b16 %v361
    %v699 = vunpack.c.l.b16 %v362
    %v700 = vunpack.c.h.b16 %v362
    %v701 = vunpack.c.l.b16 %v363
    %v702 = vunpack.c.h.b16 %v363
    %v703 = vunpack.c.l.b16 %v364
    %v704 = vunpack.c.h.b16 %v364
    %v705 = vunpack.c.l.b16 %v365
    %v706 = vunpack.c.h.b16 %v365
    %v707 = vunpack.c.l.b16 %v366
    %v708 = vunpack.c.h.b16 %v366
    %v709 = vunpack.c.l.b16 %v367
    %v710 = vunpack.c.h.b16 %v367
    %v711 = vunpack.c.l.b16 %v368
    %v712 = vunpack.c.h.b16 %v368
    %v713 = vunpack.c.l.b16 %v369
    %v714 = vunpack.c.h.b16 %v369
    %v715 = vunpack.c.l.b16 %v370
    %v716 = vunpack.c.h.b16 %v370
    %v717 = vunpack.c.l.b16 %v371
    %v718 = vunpack.c.h.b16 %v371
    %v719 = vunpack.c.l.b16 %v372
    %v720 = vunpack.c.h.b16 %v372
    %v721 = vunpack.c.l.b16 %v373
    %v722 = vunpack.c.h.b16 %v373
    %v723 = vunpack.c.l.b16 %v374
    %v724 = vunpack.c.h.b16 %v374
    %v725 = vunpack.c.l.b16 %v375
    %v726 = vunpack.c.h.b16 %v375
    %v727 = vunpack.c.l.b16 %v376
    %v728 = vunpack.c.h.b16 %v376
    %v729 = vunpack.c.l.b16 %v377
    %v730 = vunpack.c.h.b16 %v377
    %v731 = vunpack.c.l.b16 %v378
    %v732 = vunpack.c.h.b16 %v378
    %v733 = vunpack.c.l.b16 %v379
    %v734 = vunpack.c.h.b16 %v379
    %v735 = vunpack.c.l.b16 %v380
    %v736 = vunpack.c.h.b16 %v380
    %v737 = vunpack.c.l.b16 %v381
    %v738 = vunpack.c.h.b16 %v381
    %v739 = vunpack.c.l.b16 %v382
    %v740 = vunpack.c.h.b16 %v382
    %v741 = vunpack.c.l.b16 %v383
    %v742 = vunpack.c.h.b16 %v383
    %v743 = vunpack.c.l.b16 %v384
    %v744 = vunpack.c.h.b16 %v384
    %v745 = vunpack.c.l.b16 %v385
    %v746 = vunpack.c.h.b16 %v385
    %v747 = vunpack.c.l.b16 %v386
    %v748 = vunpack.c.h.b16 %v386
    %v749 = vunpack.c.l.b16 %v387
    %v750 = vunpack.c.h.b16 %v387
    %v751 = vunpack.c.l.b16 %v388
    %v752 = vunpack.c.h.b16 %v388
    %v753 = vunpack.c.l.b16 %v389
    %v754 = vunpack.c.h.b16 %v389
    %v755 = vunpack.c.l.b16 %v390
    %v756 = vunpack.c.h.b16 %v390
    %v757 = vunpack.c.l.b16 %v391
    %v758 = vunpack.c.h.b16 %v391
    %v759 = vunpack.c.l.b16 %v392
    %v760 = vunpack.c.h.b16 %v392
    %v761 = vunpack.c.l.b16 %v393
    %v762 = vunpack.c.h.b16 %v393
    %v763 = vunpack.c.l.b16 %v394
    %v764 = vunpack.c.h.b16 %v394
    %v765 = vunpack.c.l.b16 %v395
    %v766 = vunpack.c.h.b16 %v395
    %v767 = vunpack.c.l.b16 %v396
    %v768 = vunpack.c.h.b16 %v396
    %v769 = vunpack.c.l.b16 %v397
    %v770 = vunpack.c.h.b16 %v397
    %v771 = vunpack.c.l.b16 %v398
    %v772 = vunpack.c.h.b16 %v398
    %v773 = vunpack.c.l.b16 %v399
    %v774 = vunpack.c.h.b16 %v399
    %v775 = vunpack.c.l.b16 %v400
    %v776 = vunpack.c.h.b16 %v400
    %v777 = vunpack.c.l.b16 %v401
    %v778 = vunpack.c.h.b16 %v401
    %v779 = vunpack.c.l.b16 %v402
    %v780 = vunpack.c.h.b16 %v402
    %v781 = vunpack.c.l.b16 %v403
    %v782 = vunpack.c.h.b16 %v403
    %v783 = vunpack.c.l.b16 %v404
    %v784 = vunpack.c.h.b16 %v404
    %v785 = vunpack.c.l.b16 %v405
    %v786 = vunpack.c.h.b16 %v405
    %v787 = vunpack.c.l.b16 %v406
    %v788 = vunpack.c.h.b16 %v406
    %v789 = vunpack.c.l.b16 %v407
    %v790 = vunpack.c.h.b16 %v407
    %v791 = vunpack.c.l.b16 %v408
    %v792 = vunpack.c.h.b16 %v408
    %v793 = vunpack.c.l.b16 %v409
    %v794 = vunpack.c.h.b16 %v409
    %v795 = vunpack.c.l.b16 %v410
    %v796 = vunpack.c.h.b16 %v410
    %v797 = vunpack.c.l.b16 %v411
    %v798 = vunpack.c.h.b16 %v411
    %v799 = vunpack.c.l.b16 %v412
    %v800 = vunpack.c.h.b16 %v412
    %v801 = vunpack.c.l.b16 %v413
    %v802 = vunpack.c.h.b16 %v413
    %v803 = vunpack.c.l.b16 %v414
    %v804 = vunpack.c.h.b16 %v414
    %v805 = vunpack.c.l.b16 %v415
    %v806 = vunpack.c.h.b16 %v415
    %v807 = vunpack.c.l.b16 %v416
    %v808 = vunpack.c.h.b16 %v416
    %v809 = vunpack.c.l.b16 %v417
    %v810 = vunpack.c.h.b16 %v417
    %v811 = vunpack.c.l.b16 %v418
    %v812 = vunpack.c.h.b16 %v418
    %v813 = vpack.c.b16 %v561, %v557
    %v814 = vpack.c.b16 %v562, %v558
    %v815 = vpack.c.b16 %v563, %v559
    %v816 = vpack.c.b16 %v564, %v560
    %v817 = vpack.c.b16 %v569, %v565
    %v818 = vpack.c.b16 %v570, %v566
    %v819 = vpack.c.b16 %v571, %v567
    %v820 = vpack.c.b16 %v572, %v568
    %v821 = vpack.c.b16 %v577, %v573
    %v822 = vpack.c.b16 %v578, %v574
    %v823 = vpack.c.b16 %v579, %v575
    %v824 = vpack.c.b16 %v580, %v576
    %v825 = vpack.c.b16 %v585, %v581
    %v826 = vpack.c.b16 %v586, %v582
    %v827 = vpack.c.b16 %v587, %v583
    %v828 = vpack.c.b16 %v588, %v584
    %v829 = vpack.c.b16 %v593, %v589
    %v830 = vpack.c.b16 %v594, %v590
    %v831 = vpack.c.b16 %v595, %v591
    %v832 = vpack.c.b16 %v596, %v592
    %v833 = vpack.c.b16 %v601, %v597
    %v834 = vpack.c.b16 %v602, %v598
    %v835 = vpack.c.b16 %v603, %v599
    %v836 = vpack.c.b16 %v604, %v600
    %v837 = vpack.c.b16 %v609, %v605
    %v838 = vpack.c.b16 %v610, %v606
    %v839 = vpack.c.b16 %v611, %v607
    %v840 = vpack.c.b16 %v612, %v608
    %v841 = vpack.c.b16 %v617, %v613
    %v842 = vpack.c.b16 %v618, %v614
    %v843 = vpack.c.b16 %v619, %v615
    %v844 = vpack.c.b16 %v620, %v616
    %v845 = vpack.c.b16 %v625, %v621
    %v846 = vpack.c.b16 %v626, %v622
    %v847 = vpack.c.b16 %v627, %v623
    %v848 = vpack.c.b16 %v628, %v624
    %v849 = vpack.c.b16 %v633, %v629
    %v850 = vpack.c.b16 %v634, %v630
    %v851 = vpack.c.b16 %v635, %v631
    %v852 = vpack.c.b16 %v636, %v632
    %v853 = vpack.c.b16 %v641, %v637
    %v854 = vpack.c.b16 %v642, %v638
    %v855 = vpack.c.b16 %v643, %v639
    %v856 = vpack.c.b16 %v644, %v640
    %v857 = vpack.c.b16 %v649, %v645
    %v858 = vpack.c.b16 %v650, %v646
    %v859 = vpack.c.b16 %v651, %v647
    %v860 = vpack.c.b16 %v652, %v648
    %v861 = vpack.c.b16 %v657, %v653
    %v862 = vpack.c.b16 %v658, %v654
    %v863 = vpack.c.b16 %v659, %v655
    %v864 = vpack.c.b16 %v660, %v656
    %v865 = vpack.c.b16 %v665, %v661
    %v866 = vpack.c.b16 %v666, %v662
    %v867 = vpack.c.b16 %v667, %v663
    %v868 = vpack.c.b16 %v668, %v664
    %v869 = vpack.c.b16 %v673, %v669
    %v870 = vpack.c.b16 %v674, %v670
    %v871 = vpack.c.b16 %v675, %v671
    %v872 = vpack.c.b16 %v676, %v672
    %v873 = vpack.c.b16 %v681, %v677
    %v874 = vpack.c.b16 %v682, %v678
    %v875 = vpack.c.b16 %v683, %v679
    %v876 = vpack.c.b16 %v684, %v680
    %v877 = vpack.c.b16 %v689, %v685
    %v878 = vpack.c.b16 %v690, %v686
    %v879 = vpack.c.b16 %v691, %v687
    %v880 = vpack.c.b16 %v692, %v688
    %v881 = vpack.c.b16 %v697, %v693
    %v882 = vpack.c.b16 %v698, %v694
    %v883 = vpack.c.b16 %v699, %v695
    %v884 = vpack.c.b16 %v700, %v696
    %v885 = vpack.c.b16 %v705, %v701
    %v886 = vpack.c.b16 %v706, %v702
    %v887 = vpack.c.b16 %v707, %v703
    %v888 = vpack.c.b16 %v708, %v704
    %v889 = vpack.c.b16 %v713, %v709
    %v890 = vpack.c.b16 %v714, %v710
    %v891 = vpack.c.b16 %v715, %v711
    %v892 = vpack.c.b16 %v716, %v712
    %v893 = vpack.c.b16 %v721, %v717
    %v894 = vpack.c.b16 %v722, %v718
    %v895 = vpack.c.b16 %v723, %v719
    %v896 = vpack.c.b16 %v724, %v720
    %v897 = vpack.c.b16 %v729, %v725
    %v898 = vpack.c.b16 %v730, %v726
    %v899 = vpack.c.b16 %v731, %v727
    %v900 = vpack.c.b16 %v732, %v728
    %v901 = vpack.c.b16 %v737, %v733
    %v902 = vpack.c.b16 %v738, %v734
    %v903 = vpack.c.b16 %v739, %v735
    %v904 = vpack.c.b16 %v740, %v736
    %v905 = vpack.c.b16 %v745, %v741
    %v906 = vpack.c.b16 %v746, %v742
    %v907 = vpack.c.b16 %v747, %v743
    %v908 = vpack.c.b16 %v748, %v744
    %v909 = vpack.c.b16 %v753, %v749
    %v910 = vpack.c.b16 %v754, %v750
    %v911 = vpack.c.b16 %v755, %v751
    %v912 = vpack.c.b16 %v756, %v752
    %v913 = vpack.c.b16 %v761, %v757
    %v914 = vpack.c.b16 %v762, %v758
    %v915 = vpack.c.b16 %v763, %v759
    %v916 = vpack.c.b16 %v764, %v760
    %v917 = vpack.c.b16 %v769, %v765
    %v918 = vpack.c.b16 %v770, %v766
    %v919 = vpack.c.b16 %v771, %v767
    %v920 = vpack.c.b16 %v772, %v768
    %v921 = vpack.c.b16 %v777, %v773
    %v922 = vpack.c.b16 %v778, %v774
    %v923 = vpack.c.b16 %v779, %v775
    %v924 = vpack.c.b16 %v780, %v776
    %v925 = vpack.c.b16 %v785, %v781
    %v926 = vpack.c.b16 %v786, %v782
    %v927 = vpack.c.b16 %v787, %v783
    %v928 = vpack.c.b16 %v788, %v784
    %v929 = vpack.c.b16 %v793, %v789
    %v930 = vpack.c.b16 %v794, %v790
    %v931 = vpack.c.b16 %v795, %v791
    %v932 = vpack.c.b16 %v796, %v792
    %v933 = vpack.c.b16 %v801, %v797
    %v934 = vpack.c.b16 %v802, %v798
    %v935 = vpack.c.b16 %v803, %v799
    %v936 = vpack.c.b16 %v804, %v800
    %v937 = vpack.c.b16 %v809, %v805
    %v938 = vpack.c.b16 %v810, %v806
    %v939 = vpack.c.b16 %v811, %v807
    %v940 = vpack.c.b16 %v812, %v808
    %1069 = vmatpush.bf16.msra.mxu0 %v841
    %1070 = vmatpush.bf16.msra.mxu0 %v837
    %1071 = vmatpush.bf16.msra.mxu0 %v833
    %1072 = vmatpush.bf16.msra.mxu0 %v829
    %1073 = vmatpush.bf16.msra.mxu0 %v825
    %1074 = vmatpush.bf16.msra.mxu0 %v821
    %1075 = vmatpush.bf16.msra.mxu0 %v817
    %1076 = vmatpush.bf16.msra.mxu0 %v813
    %1077 = vmatmul.bf16.gmra.mxu0 %v287
    %v1078 = vpop.f32.mrf.mxu0
    %v1079 = vadd.f32 %v421, %v1078
    %v1080 = vpop.f32.mrf.mxu0
    %1081 = vdwg.mxu0
    %1082 = vmatpush.bf16.msra.mxu0 %v873
    %1083 = vmatpush.bf16.msra.mxu0 %v869
    %1084 = vmatpush.bf16.msra.mxu0 %v865
    %1085 = vmatpush.bf16.msra.mxu0 %v861
    %1086 = vmatpush.bf16.msra.mxu0 %v857
    %1087 = vmatpush.bf16.msra.mxu0 %v853
    %1088 = vmatpush.bf16.msra.mxu0 %v849
    %1089 = vmatpush.bf16.msra.mxu0 %v845
    %1090 = vmatmul.bf16.gmra.mxu0 %v288
    %v1091 = vpop.f32.mrf.mxu0
    %v1092 = vadd.f32 %v1079, %v1091
    %v1093 = vpop.f32.mrf.mxu0
    %1094 = vdwg.mxu0
    %1095 = vmatpush.bf16.msra.mxu0 %v905
    %1096 = vmatpush.bf16.msra.mxu0 %v901
    %1097 = vmatpush.bf16.msra.mxu0 %v897
    %1098 = vmatpush.bf16.msra.mxu0 %v893
    %1099 = vmatpush.bf16.msra.mxu0 %v889
    %1100 = vmatpush.bf16.msra.mxu0 %v885
    %1101 = vmatpush.bf16.msra.mxu0 %v881
    %1102 = vmatpush.bf16.msra.mxu0 %v877
    %1103 = vmatmul.bf16.gmra.mxu0 %v289
    %v1104 = vpop.f32.mrf.mxu0
    %v1105 = vadd.f32 %v1092, %v1104
    %v1106 = vpop.f32.mrf.mxu0
    %1107 = vdwg.mxu0
    %1108 = vmatpush.bf16.msra.mxu0 %v937
    %1109 = vmatpush.bf16.msra.mxu0 %v933
    %1110 = vmatpush.bf16.msra.mxu0 %v929
    %1111 = vmatpush.bf16.msra.mxu0 %v925
    %1112 = vmatpush.bf16.msra.mxu0 %v921
    %1113 = vmatpush.bf16.msra.mxu0 %v917
    %1114 = vmatpush.bf16.msra.mxu0 %v913
    %1115 = vmatpush.bf16.msra.mxu0 %v909
    %1116 = vmatmul.bf16.gmra.mxu0 %v290
    %v1117 = vpop.f32.mrf.mxu0
    %v1118 = vadd.f32 %v1105, %v1117
    %v1119 = vpop.f32.mrf.mxu0
    %1120 = vdwg.mxu0
    %1121 = vmatpush.bf16.msra.mxu0 %v842
    %1122 = vmatpush.bf16.msra.mxu0 %v838
    %1123 = vmatpush.bf16.msra.mxu0 %v834
    %1124 = vmatpush.bf16.msra.mxu0 %v830
    %1125 = vmatpush.bf16.msra.mxu0 %v826
    %1126 = vmatpush.bf16.msra.mxu0 %v822
    %1127 = vmatpush.bf16.msra.mxu0 %v818
    %1128 = vmatpush.bf16.msra.mxu0 %v814
    %1129 = vmatmul.bf16.gmra.mxu0 %v287
    %v1130 = vpop.f32.mrf.mxu0
    %v1131 = vadd.f32 %v422, %v1130
    %v1132 = vpop.f32.mrf.mxu0
    %1133 = vdwg.mxu0
    %1134 = vmatpush.bf16.msra.mxu0 %v874
    %1135 = vmatpush.bf16.msra.mxu0 %v870
    %1136 = vmatpush.bf16.msra.mxu0 %v866
    %1137 = vmatpush.bf16.msra.mxu0 %v862
    %1138 = vmatpush.bf16.msra.mxu0 %v858
    %1139 = vmatpush.bf16.msra.mxu0 %v854
    %1140 = vmatpush.bf16.msra.mxu0 %v850
    %1141 = vmatpush.bf16.msra.mxu0 %v846
    %1142 = vmatmul.bf16.gmra.mxu0 %v288
    %v1143 = vpop.f32.mrf.mxu0
    %v1144 = vadd.f32 %v1131, %v1143
    %v1145 = vpop.f32.mrf.mxu0
    %1146 = vdwg.mxu0
    %1147 = vmatpush.bf16.msra.mxu0 %v906
    %1148 = vmatpush.bf16.msra.mxu0 %v902
    %1149 = vmatpush.bf16.msra.mxu0 %v898
    %1150 = vmatpush.bf16.msra.mxu0 %v894
    %1151 = vmatpush.bf16.msra.mxu0 %v890
    %1152 = vmatpush.bf16.msra.mxu0 %v886
    %1153 = vmatpush.bf16.msra.mxu0 %v882
    %1154 = vmatpush.bf16.msra.mxu0 %v878
    %1155 = vmatmul.bf16.gmra.mxu0 %v289
    %v1156 = vpop.f32.mrf.mxu0
    %v1157 = vadd.f32 %v1144, %v1156
    %v1158 = vpop.f32.mrf.mxu0
    %1159 = vdwg.mxu0
    %1160 = vmatpush.bf16.msra.mxu0 %v938
    %1161 = vmatpush.bf16.msra.mxu0 %v934
    %1162 = vmatpush.bf16.msra.mxu0 %v930
    %1163 = vmatpush.bf16.msra.mxu0 %v926
    %1164 = vmatpush.bf16.msra.mxu0 %v922
    %1165 = vmatpush.bf16.msra.mxu0 %v918
    %1166 = vmatpush.bf16.msra.mxu0 %v914
    %1167 = vmatpush.bf16.msra.mxu0 %v910
    %1168 = vmatmul.bf16.gmra.mxu0 %v290
    %v1169 = vpop.f32.mrf.mxu0
    %v1170 = vadd.f32 %v1157, %v1169
    %v1171 = vpop.f32.mrf.mxu0
    %1172 = vdwg.mxu0
    %1173 = vmatpush.bf16.msra.mxu0 %v843
    %1174 = vmatpush.bf16.msra.mxu0 %v839
    %1175 = vmatpush.bf16.msra.mxu0 %v835
    %1176 = vmatpush.bf16.msra.mxu0 %v831
    %1177 = vmatpush.bf16.msra.mxu0 %v827
    %1178 = vmatpush.bf16.msra.mxu0 %v823
    %1179 = vmatpush.bf16.msra.mxu0 %v819
    %1180 = vmatpush.bf16.msra.mxu0 %v815
    %1181 = vmatmul.bf16.gmra.mxu0 %v287
    %v1182 = vpop.f32.mrf.mxu0
    %v1183 = vadd.f32 %v423, %v1182
    %v1184 = vpop.f32.mrf.mxu0
    %1185 = vdwg.mxu0
    %1186 = vmatpush.bf16.msra.mxu0 %v875
    %1187 = vmatpush.bf16.msra.mxu0 %v871
    %1188 = vmatpush.bf16.msra.mxu0 %v867
    %1189 = vmatpush.bf16.msra.mxu0 %v863
    %1190 = vmatpush.bf16.msra.mxu0 %v859
    %1191 = vmatpush.bf16.msra.mxu0 %v855
    %1192 = vmatpush.bf16.msra.mxu0 %v851
    %1193 = vmatpush.bf16.msra.mxu0 %v847
    %1194 = vmatmul.bf16.gmra.mxu0 %v288
    %v1195 = vpop.f32.mrf.mxu0
    %v1196 = vadd.f32 %v1183, %v1195
    %v1197 = vpop.f32.mrf.mxu0
    %1198 = vdwg.mxu0
    %1199 = vmatpush.bf16.msra.mxu0 %v907
    %1200 = vmatpush.bf16.msra.mxu0 %v903
    %1201 = vmatpush.bf16.msra.mxu0 %v899
    %1202 = vmatpush.bf16.msra.mxu0 %v895
    %1203 = vmatpush.bf16.msra.mxu0 %v891
    %1204 = vmatpush.bf16.msra.mxu0 %v887
    %1205 = vmatpush.bf16.msra.mxu0 %v883
    %1206 = vmatpush.bf16.msra.mxu0 %v879
    %1207 = vmatmul.bf16.gmra.mxu0 %v289
    %v1208 = vpop.f32.mrf.mxu0
    %v1209 = vadd.f32 %v1196, %v1208
    %v1210 = vpop.f32.mrf.mxu0
    %1211 = vdwg.mxu0
    %1212 = vmatpush.bf16.msra.mxu0 %v939
    %1213 = vmatpush.bf16.msra.mxu0 %v935
    %1214 = vmatpush.bf16.msra.mxu0 %v931
    %1215 = vmatpush.bf16.msra.mxu0 %v927
    %1216 = vmatpush.bf16.msra.mxu0 %v923
    %1217 = vmatpush.bf16.msra.mxu0 %v919
    %1218 = vmatpush.bf16.msra.mxu0 %v915
    %1219 = vmatpush.bf16.msra.mxu0 %v911
    %1220 = vmatmul.bf16.gmra.mxu0 %v290
    %v1221 = vpop.f32.mrf.mxu0
    %v1222 = vadd.f32 %v1209, %v1221
    %v1223 = vpop.f32.mrf.mxu0
    %1224 = vdwg.mxu0
    %1225 = vmatpush.bf16.msra.mxu0 %v844
    %1226 = vmatpush.bf16.msra.mxu0 %v840
    %1227 = vmatpush.bf16.msra.mxu0 %v836
    %1228 = vmatpush.bf16.msra.mxu0 %v832
    %1229 = vmatpush.bf16.msra.mxu0 %v828
    %1230 = vmatpush.bf16.msra.mxu0 %v824
    %1231 = vmatpush.bf16.msra.mxu0 %v820
    %1232 = vmatpush.bf16.msra.mxu0 %v816
    %1233 = vmatmul.bf16.gmra.mxu0 %v287
    %v1234 = vpop.f32.mrf.mxu0
    %v1235 = vadd.f32 %v424, %v1234
    %v1236 = vpop.f32.mrf.mxu0
    %1237 = vdwg.mxu0
    %1238 = vmatpush.bf16.msra.mxu0 %v876
    %1239 = vmatpush.bf16.msra.mxu0 %v872
    %1240 = vmatpush.bf16.msra.mxu0 %v868
    %1241 = vmatpush.bf16.msra.mxu0 %v864
    %1242 = vmatpush.bf16.msra.mxu0 %v860
    %1243 = vmatpush.bf16.msra.mxu0 %v856
    %1244 = vmatpush.bf16.msra.mxu0 %v852
    %1245 = vmatpush.bf16.msra.mxu0 %v848
    %1246 = vmatmul.bf16.gmra.mxu0 %v288
    %v1247 = vpop.f32.mrf.mxu0
    %v1248 = vadd.f32 %v1235, %v1247
    %v1249 = vpop.f32.mrf.mxu0
    %1250 = vdwg.mxu0
    %1251 = vmatpush.bf16.msra.mxu0 %v908
    %1252 = vmatpush.bf16.msra.mxu0 %v904
    %1253 = vmatpush.bf16.msra.mxu0 %v900
    %1254 = vmatpush.bf16.msra.mxu0 %v896
    %1255 = vmatpush.bf16.msra.mxu0 %v892
    %1256 = vmatpush.bf16.msra.mxu0 %v888
    %1257 = vmatpush.bf16.msra.mxu0 %v884
    %1258 = vmatpush.bf16.msra.mxu0 %v880
    %1259 = vmatmul.bf16.gmra.mxu0 %v289
    %v1260 = vpop.f32.mrf.mxu0
    %v1261 = vadd.f32 %v1248, %v1260
    %v1262 = vpop.f32.mrf.mxu0
    %1263 = vdwg.mxu0
    %1264 = vmatpush.bf16.msra.mxu0 %v940
    %1265 = vmatpush.bf16.msra.mxu0 %v936
    %1266 = vmatpush.bf16.msra.mxu0 %v932
    %1267 = vmatpush.bf16.msra.mxu0 %v928
    %1268 = vmatpush.bf16.msra.mxu0 %v924
    %1269 = vmatpush.bf16.msra.mxu0 %v920
    %1270 = vmatpush.bf16.msra.mxu0 %v916
    %1271 = vmatpush.bf16.msra.mxu0 %v912
    %1272 = vmatmul.bf16.gmra.mxu0 %v290
    %v1273 = vpop.f32.mrf.mxu0
    %v1274 = vadd.f32 %v1261, %v1273
    %v1275 = vpop.f32.mrf.mxu0
    %1276 = vdwg.mxu0
    %v1277 = vxor.u32 %v1118, 2147483648
    %v1278 = vxor.u32 %v1170, 2147483648
    %v1279 = vxor.u32 %v1222, 2147483648
    %v1280 = vxor.u32 %v1274, 2147483648
    %v1281 = vmul.f32 %v1277, 1.442695
    %v1282 = vpow.pop %v1281
    %v1283 = vmul.f32 %v1278, 1.442695
    %v1284 = vpow.pop %v1283
    %v1285 = vmul.f32 %v1279, 1.442695
    %v1286 = vpow.pop %v1285
    %v1287 = vmul.f32 %v1280, 1.442695
    %v1288 = vpow.pop %v1287
    %v1289 = vadd.f32 %v1282, 1.0
    %v1290 = vadd.f32 %v1284, 1.0
    %v1291 = vadd.f32 %v1286, 1.0
    %v1292 = vadd.f32 %v1288, 1.0
    %v1293 = vrcp.pop %v1289
    %v1294 = vmul.f32 %v1289, %v1293
    %v1295 = vsub.f32 1.0, %v1294
    %v1296 = vmul.f32 %v1293, %v1295
    %v1297 = vadd.f32 %v1293, %v1296
    %vm1298 = vweird.f32 %v1289
    %vm1299 = vweird.f32 %v1293
    %vm1300 = vmor %vm1298, %vm1299
    %v1301 = vsel %vm1300, %v1293, %v1297
    %v1302 = vand.u32 2147483647, %v1289
    %vm1303 = vcmp.eq.f32.partialorder %v1302, 8.507059e+37
    %v1304 = vand.u32 %v1289, 2147483648
    %v1305 = vor.u32 1.1754944e-38, %v1304
    %v1306 = vsel %vm1303, %v1305, %v1301
    %v1307 = vmul.f32 1.0, %v1306
    %v1308 = vrcp.pop %v1290
    %v1309 = vmul.f32 %v1290, %v1308
    %v1310 = vsub.f32 1.0, %v1309
    %v1311 = vmul.f32 %v1308, %v1310
    %v1312 = vadd.f32 %v1308, %v1311
    %vm1313 = vweird.f32 %v1290
    %vm1314 = vweird.f32 %v1308
    %vm1315 = vmor %vm1313, %vm1314
    %v1316 = vsel %vm1315, %v1308, %v1312
    %v1317 = vand.u32 2147483647, %v1290
    %vm1318 = vcmp.eq.f32.partialorder %v1317, 8.507059e+37
    %v1319 = vand.u32 %v1290, 2147483648
    %v1320 = vor.u32 1.1754944e-38, %v1319
    %v1321 = vsel %vm1318, %v1320, %v1316
    %v1322 = vmul.f32 1.0, %v1321
    %v1323 = vrcp.pop %v1291
    %v1324 = vmul.f32 %v1291, %v1323
    %v1325 = vsub.f32 1.0, %v1324
    %v1326 = vmul.f32 %v1323, %v1325
    %v1327 = vadd.f32 %v1323, %v1326
    %vm1328 = vweird.f32 %v1291
    %vm1329 = vweird.f32 %v1323
    %vm1330 = vmor %vm1328, %vm1329
    %v1331 = vsel %vm1330, %v1323, %v1327
    %v1332 = vand.u32 2147483647, %v1291
    %vm1333 = vcmp.eq.f32.partialorder %v1332, 8.507059e+37
    %v1334 = vand.u32 %v1291, 2147483648
    %v1335 = vor.u32 1.1754944e-38, %v1334
    %v1336 = vsel %vm1333, %v1335, %v1331
    %v1337 = vmul.f32 1.0, %v1336
    %v1338 = vrcp.pop %v1292
    %v1339 = vmul.f32 %v1292, %v1338
    %v1340 = vsub.f32 1.0, %v1339
    %v1341 = vmul.f32 %v1338, %v1340
    %v1342 = vadd.f32 %v1338, %v1341
    %vm1343 = vweird.f32 %v1292
    %vm1344 = vweird.f32 %v1338
    %vm1345 = vmor %vm1343, %vm1344
    %v1346 = vsel %vm1345, %v1338, %v1342
    %v1347 = vand.u32 2147483647, %v1292
    %vm1348 = vcmp.eq.f32.partialorder %v1347, 8.507059e+37
    %v1349 = vand.u32 %v1292, 2147483648
    %v1350 = vor.u32 1.1754944e-38, %v1349
    %v1351 = vsel %vm1348, %v1350, %v1346
    %v1352 = vmul.f32 1.0, %v1351
    %v1353 = vmul.f32 %v1118, %v1307
    %v1354 = vmul.f32 %v1170, %v1322
    %v1355 = vmul.f32 %v1222, %v1337
    %v1356 = vmul.f32 %v1274, %v1352
    %v1357 = vpack.c.bf16 %v1353, %v1353
    %v1358 = vpack.c.bf16 %v1354, %v1354
    %v1359 = vpack.c.bf16 %v1355, %v1355
    %v1360 = vpack.c.bf16 %v1356, %v1356
    %v1361 = vld [vmem:[#allocation11] sm:$0xf]
    %v1362 = vld [vmem:[#allocation11 + $0x4] sm:$0xf]
    %v1363 = vld [vmem:[#allocation11 + $0x8] sm:$0xf]
    %v1364 = vld [vmem:[#allocation11 + $0xc] sm:$0xf]
    %v1365 = vld [vmem:[#allocation11 + $0x10] sm:$0xf]
    %v1366 = vld [vmem:[#allocation11 + $0x14] sm:$0xf]
    %v1367 = vld [vmem:[#allocation11 + $0x18] sm:$0xf]
    %v1368 = vld [vmem:[#allocation11 + $0x1c] sm:$0xf]
    %v1369 = vld [vmem:[#allocation11 + $0x20] sm:$0xf]
    %v1370 = vld [vmem:[#allocation11 + $0x24] sm:$0xf]
    %v1371 = vld [vmem:[#allocation11 + $0x28] sm:$0xf]
    %v1372 = vld [vmem:[#allocation11 + $0x2c] sm:$0xf]
    %v1373 = vld [vmem:[#allocation11 + $0x30] sm:$0xf]
    %v1374 = vld [vmem:[#allocation11 + $0x34] sm:$0xf]
    %v1375 = vld [vmem:[#allocation11 + $0x38] sm:$0xf]
    %v1376 = vld [vmem:[#allocation11 + $0x3c] sm:$0xf]
    %v1377 = vld [vmem:[#allocation11 + $0x40] sm:$0xf]
    %v1378 = vld [vmem:[#allocation11 + $0x44] sm:$0xf]
    %v1379 = vld [vmem:[#allocation11 + $0x48] sm:$0xf]
    %v1380 = vld [vmem:[#allocation11 + $0x4c] sm:$0xf]
    %v1381 = vld [vmem:[#allocation11 + $0x50] sm:$0xf]
    %v1382 = vld [vmem:[#allocation11 + $0x54] sm:$0xf]
    %v1383 = vld [vmem:[#allocation11 + $0x58] sm:$0xf]
    %v1384 = vld [vmem:[#allocation11 + $0x5c] sm:$0xf]
    %v1385 = vld [vmem:[#allocation11 + $0x60] sm:$0xf]
    %v1386 = vld [vmem:[#allocation11 + $0x64] sm:$0xf]
    %v1387 = vld [vmem:[#allocation11 + $0x68] sm:$0xf]
    %v1388 = vld [vmem:[#allocation11 + $0x6c] sm:$0xf]
    %v1389 = vld [vmem:[#allocation11 + $0x70] sm:$0xf]
    %v1390 = vld [vmem:[#allocation11 + $0x74] sm:$0xf]
    %v1391 = vld [vmem:[#allocation11 + $0x78] sm:$0xf]
    %v1392 = vld [vmem:[#allocation11 + $0x7c] sm:$0xf]
    %v1393 = vld [vmem:[#allocation11 + $0x80] sm:$0xf]
    %v1394 = vld [vmem:[#allocation11 + $0x84] sm:$0xf]
    %v1395 = vld [vmem:[#allocation11 + $0x88] sm:$0xf]
    %v1396 = vld [vmem:[#allocation11 + $0x8c] sm:$0xf]
    %v1397 = vld [vmem:[#allocation11 + $0x90] sm:$0xf]
    %v1398 = vld [vmem:[#allocation11 + $0x94] sm:$0xf]
    %v1399 = vld [vmem:[#allocation11 + $0x98] sm:$0xf]
    %v1400 = vld [vmem:[#allocation11 + $0x9c] sm:$0xf]
    %v1401 = vld [vmem:[#allocation11 + $0xa0] sm:$0xf]
    %v1402 = vld [vmem:[#allocation11 + $0xa4] sm:$0xf]
    %v1403 = vld [vmem:[#allocation11 + $0xa8] sm:$0xf]
    %v1404 = vld [vmem:[#allocation11 + $0xac] sm:$0xf]
    %v1405 = vld [vmem:[#allocation11 + $0xb0] sm:$0xf]
    %v1406 = vld [vmem:[#allocation11 + $0xb4] sm:$0xf]
    %v1407 = vld [vmem:[#allocation11 + $0xb8] sm:$0xf]
    %v1408 = vld [vmem:[#allocation11 + $0xbc] sm:$0xf]
    %v1409 = vld [vmem:[#allocation11 + $0xc0] sm:$0xf]
    %v1410 = vld [vmem:[#allocation11 + $0xc4] sm:$0xf]
    %v1411 = vld [vmem:[#allocation11 + $0xc8] sm:$0xf]
    %v1412 = vld [vmem:[#allocation11 + $0xcc] sm:$0xf]
    %v1413 = vld [vmem:[#allocation11 + $0xd0] sm:$0xf]
    %v1414 = vld [vmem:[#allocation11 + $0xd4] sm:$0xf]
    %v1415 = vld [vmem:[#allocation11 + $0xd8] sm:$0xf]
    %v1416 = vld [vmem:[#allocation11 + $0xdc] sm:$0xf]
    %v1417 = vld [vmem:[#allocation11 + $0xe0] sm:$0xf]
    %v1418 = vld [vmem:[#allocation11 + $0xe4] sm:$0xf]
    %v1419 = vld [vmem:[#allocation11 + $0xe8] sm:$0xf]
    %v1420 = vld [vmem:[#allocation11 + $0xec] sm:$0xf]
    %v1421 = vld [vmem:[#allocation11 + $0xf0] sm:$0xf]
    %v1422 = vld [vmem:[#allocation11 + $0xf4] sm:$0xf]
    %v1423 = vld [vmem:[#allocation11 + $0xf8] sm:$0xf]
    %v1424 = vld [vmem:[#allocation11 + $0xfc] sm:$0xf]
    %v1425 = vld [vmem:[%s6] sm:$0x1]
    %v1427 = vperm.slane %v1425, 0
    %v1493 = vunpack.c.l.b16 %v1361
    %v1494 = vunpack.c.l.b16 %v1362
    %v1495 = vunpack.c.l.b16 %v1363
    %v1496 = vunpack.c.l.b16 %v1364
    %v1497 = vunpack.c.l.b16 %v1365
    %v1498 = vunpack.c.l.b16 %v1366
    %v1499 = vunpack.c.l.b16 %v1367
    %v1500 = vunpack.c.l.b16 %v1368
    %v1501 = vunpack.c.l.b16 %v1369
    %v1502 = vunpack.c.l.b16 %v1370
    %v1503 = vunpack.c.l.b16 %v1371
    %v1504 = vunpack.c.l.b16 %v1372
    %v1505 = vunpack.c.l.b16 %v1373
    %v1506 = vunpack.c.l.b16 %v1374
    %v1507 = vunpack.c.l.b16 %v1375
    %v1508 = vunpack.c.l.b16 %v1376
    %v1509 = vunpack.c.l.b16 %v1377
    %v1510 = vunpack.c.l.b16 %v1378
    %v1511 = vunpack.c.l.b16 %v1379
    %v1512 = vunpack.c.l.b16 %v1380
    %v1513 = vunpack.c.l.b16 %v1381
    %v1514 = vunpack.c.l.b16 %v1382
    %v1515 = vunpack.c.l.b16 %v1383
    %v1516 = vunpack.c.l.b16 %v1384
    %v1517 = vunpack.c.l.b16 %v1385
    %v1518 = vunpack.c.l.b16 %v1386
    %v1519 = vunpack.c.l.b16 %v1387
    %v1520 = vunpack.c.l.b16 %v1388
    %v1521 = vunpack.c.l.b16 %v1389
    %v1522 = vunpack.c.l.b16 %v1390
    %v1523 = vunpack.c.l.b16 %v1391
    %v1524 = vunpack.c.l.b16 %v1392
    %v1525 = vunpack.c.l.b16 %v1393
    %v1526 = vunpack.c.l.b16 %v1394
    %v1527 = vunpack.c.l.b16 %v1395
    %v1528 = vunpack.c.l.b16 %v1396
    %v1529 = vunpack.c.l.b16 %v1397
    %v1530 = vunpack.c.l.b16 %v1398
    %v1531 = vunpack.c.l.b16 %v1399
    %v1532 = vunpack.c.l.b16 %v1400
    %v1533 = vunpack.c.l.b16 %v1401
    %v1534 = vunpack.c.l.b16 %v1402
    %v1535 = vunpack.c.l.b16 %v1403
    %v1536 = vunpack.c.l.b16 %v1404
    %v1537 = vunpack.c.l.b16 %v1405
    %v1538 = vunpack.c.l.b16 %v1406
    %v1539 = vunpack.c.l.b16 %v1407
    %v1540 = vunpack.c.l.b16 %v1408
    %v1541 = vunpack.c.l.b16 %v1409
    %v1542 = vunpack.c.l.b16 %v1410
    %v1543 = vunpack.c.l.b16 %v1411
    %v1544 = vunpack.c.l.b16 %v1412
    %v1545 = vunpack.c.l.b16 %v1413
    %v1546 = vunpack.c.l.b16 %v1414
    %v1547 = vunpack.c.l.b16 %v1415
    %v1548 = vunpack.c.l.b16 %v1416
    %v1549 = vunpack.c.l.b16 %v1417
    %v1550 = vunpack.c.l.b16 %v1418
    %v1551 = vunpack.c.l.b16 %v1419
    %v1552 = vunpack.c.l.b16 %v1420
    %v1553 = vunpack.c.l.b16 %v1421
    %v1554 = vunpack.c.l.b16 %v1422
    %v1555 = vunpack.c.l.b16 %v1423
    %v1556 = vunpack.c.l.b16 %v1424
    %v1557 = vpack.c.b16 %v1494, %v1493
    %v1558 = vpack.c.b16 %v1496, %v1495
    %v1559 = vpack.c.b16 %v1498, %v1497
    %v1560 = vpack.c.b16 %v1500, %v1499
    %v1561 = vpack.c.b16 %v1502, %v1501
    %v1562 = vpack.c.b16 %v1504, %v1503
    %v1563 = vpack.c.b16 %v1506, %v1505
    %v1564 = vpack.c.b16 %v1508, %v1507
    %v1565 = vpack.c.b16 %v1510, %v1509
    %v1566 = vpack.c.b16 %v1512, %v1511
    %v1567 = vpack.c.b16 %v1514, %v1513
    %v1568 = vpack.c.b16 %v1516, %v1515
    %v1569 = vpack.c.b16 %v1518, %v1517
    %v1570 = vpack.c.b16 %v1520, %v1519
    %v1571 = vpack.c.b16 %v1522, %v1521
    %v1572 = vpack.c.b16 %v1524, %v1523
    %v1573 = vpack.c.b16 %v1526, %v1525
    %v1574 = vpack.c.b16 %v1528, %v1527
    %v1575 = vpack.c.b16 %v1530, %v1529
    %v1576 = vpack.c.b16 %v1532, %v1531
    %v1577 = vpack.c.b16 %v1534, %v1533
    %v1578 = vpack.c.b16 %v1536, %v1535
    %v1579 = vpack.c.b16 %v1538, %v1537
    %v1580 = vpack.c.b16 %v1540, %v1539
    %v1581 = vpack.c.b16 %v1542, %v1541
    %v1582 = vpack.c.b16 %v1544, %v1543
    %v1583 = vpack.c.b16 %v1546, %v1545
    %v1584 = vpack.c.b16 %v1548, %v1547
    %v1585 = vpack.c.b16 %v1550, %v1549
    %v1586 = vpack.c.b16 %v1552, %v1551
    %v1587 = vpack.c.b16 %v1554, %v1553
    %v1588 = vpack.c.b16 %v1556, %v1555
    %1621 = vmatpush.bf16.msra.mxu0 %v1564
    %1622 = vmatpush.bf16.msra.mxu0 %v1563
    %1623 = vmatpush.bf16.msra.mxu0 %v1562
    %1624 = vmatpush.bf16.msra.mxu0 %v1561
    %1625 = vmatpush.bf16.msra.mxu0 %v1560
    %1626 = vmatpush.bf16.msra.mxu0 %v1559
    %1627 = vmatpush.bf16.msra.mxu0 %v1558
    %1628 = vmatpush.bf16.msra.mxu0 %v1557
    %1629 = vmatmul.bf16.gmra.mxu0 %v1357
    %v1630 = vpop.f32.mrf.mxu0
    %v1631 = vadd.f32 %v1427, %v1630
    %v1632 = vpop.f32.mrf.mxu0
    %1633 = vdwg.mxu0
    %1634 = vmatpush.bf16.msra.mxu0 %v1572
    %1635 = vmatpush.bf16.msra.mxu0 %v1571
    %1636 = vmatpush.bf16.msra.mxu0 %v1570
    %1637 = vmatpush.bf16.msra.mxu0 %v1569
    %1638 = vmatpush.bf16.msra.mxu0 %v1568
    %1639 = vmatpush.bf16.msra.mxu0 %v1567
    %1640 = vmatpush.bf16.msra.mxu0 %v1566
    %1641 = vmatpush.bf16.msra.mxu0 %v1565
    %1642 = vmatmul.bf16.gmra.mxu0 %v1358
    %v1643 = vpop.f32.mrf.mxu0
    %v1644 = vadd.f32 %v1631, %v1643
    %v1645 = vpop.f32.mrf.mxu0
    %1646 = vdwg.mxu0
    %1647 = vmatpush.bf16.msra.mxu0 %v1580
    %1648 = vmatpush.bf16.msra.mxu0 %v1579
    %1649 = vmatpush.bf16.msra.mxu0 %v1578
    %1650 = vmatpush.bf16.msra.mxu0 %v1577
    %1651 = vmatpush.bf16.msra.mxu0 %v1576
    %1652 = vmatpush.bf16.msra.mxu0 %v1575
    %1653 = vmatpush.bf16.msra.mxu0 %v1574
    %1654 = vmatpush.bf16.msra.mxu0 %v1573
    %1655 = vmatmul.bf16.gmra.mxu0 %v1359
    %v1656 = vpop.f32.mrf.mxu0
    %v1657 = vadd.f32 %v1644, %v1656
    %v1658 = vpop.f32.mrf.mxu0
    %1659 = vdwg.mxu0
    %1660 = vmatpush.bf16.msra.mxu0 %v1588
    %1661 = vmatpush.bf16.msra.mxu0 %v1587
    %1662 = vmatpush.bf16.msra.mxu0 %v1586
    %1663 = vmatpush.bf16.msra.mxu0 %v1585
    %1664 = vmatpush.bf16.msra.mxu0 %v1584
    %1665 = vmatpush.bf16.msra.mxu0 %v1583
    %1666 = vmatpush.bf16.msra.mxu0 %v1582
    %1667 = vmatpush.bf16.msra.mxu0 %v1581
    %1668 = vmatmul.bf16.gmra.mxu0 %v1360
    %v1669 = vpop.f32.mrf.mxu0
    %v1670 = vadd.f32 %v1657, %v1669
    %v1671 = vpop.f32.mrf.mxu0
    %1672 = vdwg.mxu0
    %1673 = vst [vmem:[#allocation13] sm:$0xff] %v1670
    // Predicated region
    $region54: #{tpu_custom_call.1} parent=1 // pred_check
      _
    $region55: #{tpu_custom_call.1} parent=1 // pred_check_branch
      %1675 = sbr.rel (0) target = $region57
    $region56: #{tpu_custom_call.1} parent=1 // pred_region
      %1677 = vsyncadd [#allocation4], 0
      %s1679 = sshll.u32 [#allocation13], 4
      %s1680 = int_to_ptr.vmem [resolvable:$true] %s1679
      %s1681 = sshll.u32 %s7, 4
      %s1682 = int_to_ptr.hbm [resolvable:$true] %s1681
      %1684 = dma.vmem_to_hbm [thread:$0]  %s1680, 128, %s1682, [#allocation4]
    $region57: #{tpu_custom_call.1} parent=1 // pred_fallthru
      _
    // Predicated region
    $region58: #{tpu_custom_call.1} parent=1 // pred_check
      _
    $region59: #{tpu_custom_call.1} parent=1 // pred_check_branch
      %1686 = sbr.rel (0) target = $region61
    $region60: #{tpu_custom_call.1} parent=1 // pred_region
      %1688 = dma.done [#allocation4], 128
    $region61: #{tpu_custom_call.1} parent=1 // pred_fallthru
      _
    %1689 = vsyncpa [#allocation3], 1
    %1690 = vsyncpa [#allocation6], 1
    %1691 = vsyncpa [#allocation9], 1
    %1692 = vsyncpa [#allocation12], 1
    %1693 = vsyncpa [#allocation4], 1

</llo_original>
